<compile_context>
chip_gen: v5e
topology: v5e:2x2
jax: 0.10.0
libtpu: 0.0.40
codegen_flags: <defaults>
</compile_context>

<pallas_src>
import functools

import jax
import jax.numpy as jnp
from jax import lax
from jax.experimental import pallas as pl
from jax.experimental.pallas import tpu as pltpu

_LANE = 128


def _round_up(v, m):
    return (v + m - 1) // m * m


# ---------------------------------------------------------------------------
# Kernels
# ---------------------------------------------------------------------------

def _edge_agg1_kernel(h_ref, x_ref, w1_ref, binv_ref, xe1_ref, acc_ref):
    """XE1 = B^{-1} H^T (X W1), reduced over node tiles (grid axis 0)."""
    j = pl.program_id(0)

    @pl.when(j == 0)
    def _():
        acc_ref[...] = jnp.zeros_like(acc_ref)

    xw = jnp.dot(x_ref[...], w1_ref[...],
                 preferred_element_type=jnp.float32)              # (tn, Ch) f32
    # H^T contribution without materializing a transpose: contract node dim 0.
    acc_ref[...] += lax.dot_general(
        h_ref[...], xw.astype(jnp.bfloat16),
        dimension_numbers=(((0,), (0,)), ((), ())),
        preferred_element_type=jnp.float32)                       # (M, Ch)

    @pl.when(j == pl.num_programs(0) - 1)
    def _():
        xe1_ref[...] = acc_ref[...] * binv_ref[...]               # B^{-1}, f32 VPU


def _fused_mid_kernel(h_ref, dinv_ref, xe1_ref, b1_ref, w2_ref, binv_ref,
                      xe2_ref, acc_ref):
    """X1 = relu(D^{-1} H XE1 + b1); XE2 = B^{-1} H^T (X1 W2), accumulated."""
    i = pl.program_id(0)

    @pl.when(i == 0)
    def _():
        acc_ref[...] = jnp.zeros_like(acc_ref)

    h = h_ref[...]                                                # (tn, M) bf16
    xn = jnp.dot(h, xe1_ref[...].astype(jnp.bfloat16),
                 preferred_element_type=jnp.float32)              # (tn, Ch) f32
    x1 = jnp.maximum(xn * dinv_ref[...] + b1_ref[...], 0.0)       # f32 VPU
    # TODO(synk): F.dropout training-mode mask omitted (eval-mode identity);
    # add pltpu.prng_seed + pltpu.prng_random_bits here for training parity.

    xw2 = jnp.dot(x1.astype(jnp.bfloat16), w2_ref[...],
                  preferred_element_type=jnp.float32)             # (tn, Co) f32
    acc_ref[...] += lax.dot_general(
        h, xw2.astype(jnp.bfloat16),
        dimension_numbers=(((0,), (0,)), ((), ())),
        preferred_element_type=jnp.float32)                       # (M, Co)

    @pl.when(i == pl.num_programs(0) - 1)
    def _():
        xe2_ref[...] = acc_ref[...] * binv_ref[...]


def _node_agg2_kernel(h_ref, dinv_ref, xe2_ref, b2_ref, out_ref):
    """OUT = D^{-1} H XE2 + b2, independent per node tile (parallel axis)."""
    xn = jnp.dot(h_ref[...], xe2_ref[...].astype(jnp.bfloat16),
                 preferred_element_type=jnp.float32)              # (tn, Co) f32
    out_ref[...] = xn * dinv_ref[...] + b2_ref[...]


# ---------------------------------------------------------------------------
# Wrapper
# ---------------------------------------------------------------------------

@functools.partial(jax.jit, static_argnames=("num_edges", "node_tile"))
def hypergraph_forward(x, edge_index, w1, b1, w2, b2, *, num_edges,
                       node_tile=128):
    """x: (N, C_in) f32; edge_index: (2, E) int32 [node_idx; hyperedge_idx]."""
    n, c_in = x.shape
    c_hid = w1.shape[1]
    c_out = w2.shape[1]

    # --- plain-JAX glue: dense incidence + guarded inverse degrees ---------
    h = jnp.zeros((n, num_edges), jnp.float32).at[
        edge_index[0], edge_index[1]].add(1.0)
    d = jnp.sum(h, axis=1, keepdims=True)                          # (N, 1)
    e = jnp.sum(h, axis=0, keepdims=True)                          # (1, M)
    dinv = jnp.where(d > 0.0, 1.0 / jnp.maximum(d, 1.0), 0.0)      # no 1/0 formed
    binv = jnp.where(e > 0.0, 1.0 / jnp.maximum(e, 1.0), 0.0).T    # (M, 1)

    # --- zero-pad to tile / lane-dense shapes (exact no-ops) ---------------
    tn = max(8, node_tile)
    np_ = _round_up(n, tn)
    mp = _round_up(num_edges, _LANE)
    ci = _round_up(c_in, _LANE)
    ch = _round_up(c_hid, _LANE)
    co = _round_up(c_out, _LANE)
    gn = np_ // tn

    f32, bf16 = jnp.float32, jnp.bfloat16
    h_p = jnp.zeros((np_, mp), f32).at[:n, :num_edges].set(h).astype(bf16)
    x_p = jnp.zeros((np_, ci), f32).at[:n, :c_in].set(x).astype(bf16)
    dinv_p = jnp.zeros((np_, 1), f32).at[:n].set(dinv)
    binv_p = jnp.zeros((mp, 1), f32).at[:num_edges].set(binv)
    w1_p = jnp.zeros((ci, ch), f32).at[:c_in, :c_hid].set(w1).astype(bf16)
    w2_p = jnp.zeros((ch, co), f32).at[:c_hid, :c_out].set(w2).astype(bf16)
    b1_p = jnp.zeros((1, ch), f32).at[0, :c_hid].set(b1)
    b2_p = jnp.zeros((1, co), f32).at[0, :c_out].set(b2)

    vmem_cap = 48 * 1024 * 1024   # under v7x's 64 MiB physical VMEM per TC

    def cparams(sem):
        return pltpu.CompilerParams(dimension_semantics=sem,
                                    vmem_limit_bytes=vmem_cap)

    tile = lambda i: (i, 0)
    whole = lambda i: (0, 0)

    # --- 1) XE1 = B^{-1} H^T (X W1)  (reduction over node tiles) -----------
    xe1 = pl.pallas_call(
        _edge_agg1_kernel,
        out_shape=jax.ShapeDtypeStruct((mp, ch), f32),
        grid=(gn,),
        in_specs=[pl.BlockSpec((tn, mp), tile),      # H tile (streamed)
                  pl.BlockSpec((tn, ci), tile),      # X tile (streamed)
                  pl.BlockSpec((ci, ch), whole),     # W1 (resident)
                  pl.BlockSpec((mp, 1), whole)],     # B^{-1} (resident)
        out_specs=pl.BlockSpec((mp, ch), whole),
        scratch_shapes=[pltpu.VMEM((mp, ch), f32)],
        compiler_params=cparams(("arbitrary",)),
    )(h_p, x_p, w1_p, binv_p)

    # --- 2) X1 = relu(D^{-1} H XE1 + b1); XE2 = B^{-1} H^T (X1 W2) ---------
    xe2 = pl.pallas_call(
        _fused_mid_kernel,
        out_shape=jax.ShapeDtypeStruct((mp, co), f32),
        grid=(gn,),
        in_specs=[pl.BlockSpec((tn, mp), tile),      # H tile
                  pl.BlockSpec((tn, 1), tile),       # D^{-1} tile
                  pl.BlockSpec((mp, ch), whole),     # XE1 (resident)
                  pl.BlockSpec((1, ch), whole),      # b1
                  pl.BlockSpec((ch, co), whole),     # W2
                  pl.BlockSpec((mp, 1), whole)],     # B^{-1}
        out_specs=pl.BlockSpec((mp, co), whole),
        scratch_shapes=[pltpu.VMEM((mp, co), f32)],
        compiler_params=cparams(("arbitrary",)),
    )(h_p, dinv_p, xe1, b1_p, w2_p, binv_p)

    # --- 3) OUT = D^{-1} H XE2 + b2  (independent node tiles → parallel) ---
    out = pl.pallas_call(
        _node_agg2_kernel,
        out_shape=jax.ShapeDtypeStruct((np_, co), f32),
        grid=(gn,),
        in_specs=[pl.BlockSpec((tn, mp), tile),
                  pl.BlockSpec((tn, 1), tile),
                  pl.BlockSpec((mp, co), whole),
                  pl.BlockSpec((1, co), whole)],
        out_specs=pl.BlockSpec((tn, co), tile),
        compiler_params=cparams(("parallel",)),
    )(h_p, dinv_p, xe2, b2_p)

    return out[:n, :c_out]


# ---------------------------------------------------------------------------
# Reference (pure JAX, f32) + demo
# ---------------------------------------------------------------------------

def _reference_forward(x, edge_index, w1, b1, w2, b2, num_edges):
    n = x.shape[0]
    h = jnp.zeros((n, num_edges), jnp.float32).at[
        edge_index[0], edge_index[1]].add(1.0)
    d = jnp.sum(h, axis=1, keepdims=True)
    e = jnp.sum(h, axis=0, keepdims=True)
    dinv = jnp.where(d > 0.0, 1.0 / jnp.maximum(d, 1.0), 0.0)
    binv = jnp.where(e > 0.0, 1.0 / jnp.maximum(e, 1.0), 0.0)

    def conv(f, w, bias):
        xw = f @ w
        xe = (h.T @ xw) * binv.T
        return (h @ xe) * dinv + bias

    x1 = jax.nn.relu(conv(x, w1, b1))
    return conv(x1, w2, b2)


def _glorot(key, shape):
    fan_in, fan_out = shape
    limit = jnp.sqrt(6.0 / (fan_in + fan_out))
    return jax.random.uniform(key, shape, jnp.float32, -limit, limit)


if __name__ == "__main__":
    key = jax.random.PRNGKey(0)
    k_x, k_w1, k_w2 = jax.random.split(key, 3)

    # Small shapes consistent with the module defaults (128-channel convs).
    N, M = 256, 128
    C_IN = C_HID = C_OUT = 128

    x = jax.random.normal(k_x, (N, C_IN), jnp.float32)

    # Deterministic incidence list: each node belongs to two hyperedges.
    nodes = jnp.arange(N, dtype=jnp.int32)
    src = jnp.concatenate([nodes, nodes])
    dst = jnp.concatenate([nodes % M, (nodes // 2) % M]).astype(jnp.int32)
    edge_index = jnp.stack([src, dst])              # (2, E), E = 2N

    # PyG defaults: glorot linear weight, zero bias.
    w1 = _glorot(k_w1, (C_IN, C_HID))
    b1 = jnp.zeros((C_HID,), jnp.float32)
    w2 = _glorot(k_w2, (C_HID, C_OUT))
    b2 = jnp.zeros((C_OUT,), jnp.float32)

    out = hypergraph_forward(x, edge_index, w1, b1, w2, b2,
                             num_edges=M, node_tile=128)
    jax.block_until_ready(out)

    ref = _reference_forward(x, edge_index, w1, b1, w2, b2, M)
    assert out.shape == (N, C_OUT)
    assert bool(jnp.all(jnp.isfinite(out)))
    assert bool(jnp.allclose(out, ref, rtol=5e-2, atol=5e-2)), (
        "max abs diff %f" % float(jnp.max(jnp.abs(out - ref))))
    print("KERNEL_OK")
</pallas_src>

<mosaic_0001>
module attributes {stable_mosaic.version = 11 : i64} {
  func.func @_edge_agg1_kernel(%arg0: i32, %arg1: memref<128x128xbf16, #tpu.memory_space<vmem>>, %arg2: memref<128x128xbf16, #tpu.memory_space<vmem>>, %arg3: memref<128x128xbf16, #tpu.memory_space<vmem>>, %arg4: memref<128x1xf32, #tpu.memory_space<vmem>>, %arg5: memref<128x128xf32, #tpu.memory_space<vmem>>, %arg6: memref<128x128xf32, #tpu.memory_space<vmem>>) attributes {dimension_semantics = [#tpu.dimension_semantics<arbitrary>], iteration_bounds = array<i64: 2>, scalar_prefetch = 0 : i64, scratch_operands = 1 : i64, tpu.core_type = #tpu.core_type<tc>, window_params = [{transform_indices = @transform_0, window_bounds = array<i64: 128, 128>}, {transform_indices = @transform_1, window_bounds = array<i64: 128, 128>}, {pipeline_mode = #tpu.pipeline_mode<synchronous>, transform_indices = @transform_2, window_bounds = array<i64: 128, 128>}, {pipeline_mode = #tpu.pipeline_mode<synchronous>, transform_indices = @transform_3, window_bounds = array<i64: 128, 1>}, {pipeline_mode = #tpu.pipeline_mode<synchronous>, transform_indices = @transform_4, window_bounds = array<i64: 128, 128>}]} {
    %c0_i32 = arith.constant 0 : i32
    %0 = arith.cmpi eq, %arg0, %c0_i32 : i32
    %1 = arith.extui %0 : i1 to i32
    %c0_i32_0 = arith.constant 0 : i32
    %2 = arith.cmpi ne, %1, %c0_i32_0 : i32
    scf.if %2 {
      %cst_12 = arith.constant 0.000000e+00 : f32
      %15 = vector.broadcast %cst_12 : f32 to vector<128x128xf32>
      %c0_13 = arith.constant 0 : index
      %c0_14 = arith.constant 0 : index
      %16 = vector.load %arg6[%c0_13, %c0_14] : memref<128x128xf32, #tpu.memory_space<vmem>>, vector<128x128xf32>
      tpu.vector_store %arg6[%c0_13, %c0_14], %15 {strides = array<i32>} : memref<128x128xf32, #tpu.memory_space<vmem>>, vector<128x128xf32>,
    } else {
    }
    %c0 = arith.constant 0 : index
    %c0_1 = arith.constant 0 : index
    %3 = vector.load %arg2[%c0, %c0_1] : memref<128x128xbf16, #tpu.memory_space<vmem>>, vector<128x128xbf16>
    %c0_2 = arith.constant 0 : index
    %c0_3 = arith.constant 0 : index
    %4 = vector.load %arg3[%c0_2, %c0_3] : memref<128x128xbf16, #tpu.memory_space<vmem>>, vector<128x128xbf16>
    %cst = arith.constant dense<0.000000e+00> : vector<128x128xf32>
    %5 = tpu.matmul %3, %4, %cst {dimension_numbers = #tpu.dot_dimension_numbers<[1], [0], [0], [1], [0, 0, 1, 1], [], []>} : vector<128x128xbf16>, vector<128x128xbf16>, vector<128x128xf32> -> vector<128x128xf32>
    %c0_4 = arith.constant 0 : index
    %c0_5 = arith.constant 0 : index
    %6 = vector.load %arg6[%c0_4, %c0_5] : memref<128x128xf32, #tpu.memory_space<vmem>>, vector<128x128xf32>
    %c0_6 = arith.constant 0 : index
    %c0_7 = arith.constant 0 : index
    %7 = vector.load %arg1[%c0_6, %c0_7] : memref<128x128xbf16, #tpu.memory_space<vmem>>, vector<128x128xbf16>
    %8 = arith.truncf %5 : vector<128x128xf32> to vector<128x128xbf16>
    %cst_8 = arith.constant dense<0.000000e+00> : vector<128x128xf32>
    %9 = tpu.matmul %7, %8, %cst_8 {dimension_numbers = #tpu.dot_dimension_numbers<[0], [0], [1], [1], [0, 1, 1, 1], [], []>} : vector<128x128xbf16>, vector<128x128xbf16>, vector<128x128xf32> -> vector<128x128xf32>
    %10 = arith.addf %6, %9 : vector<128x128xf32>
    %c0_9 = arith.constant 0 : index
    %c0_10 = arith.constant 0 : index
    %11 = vector.load %arg6[%c0_9, %c0_10] : memref<128x128xf32, #tpu.memory_space<vmem>>, vector<128x128xf32>
    tpu.vector_store %arg6[%c0_9, %c0_10], %10 {strides = array<i32>} : memref<128x128xf32, #tpu.memory_space<vmem>>, vector<128x128xf32>,
    %c1_i32 = arith.constant 1 : i32
    %12 = arith.cmpi eq, %arg0, %c1_i32 : i32
    %13 = arith.extui %12 : i1 to i32
    %c0_i32_11 = arith.constant 0 : i32
    %14 = arith.cmpi ne, %13, %c0_i32_11 : i32
    scf.if %14 {
      %c0_12 = arith.constant 0 : index
      %c0_13 = arith.constant 0 : index
      %15 = vector.load %arg6[%c0_12, %c0_13] : memref<128x128xf32, #tpu.memory_space<vmem>>, vector<128x128xf32>
      %c0_14 = arith.constant 0 : index
      %c0_15 = arith.constant 0 : index
      %16 = vector.load %arg4[%c0_14, %c0_15] : memref<128x1xf32, #tpu.memory_space<vmem>>, vector<128x1xf32>
      %17 = vector.broadcast %16 : vector<128x1xf32> to vector<128x128xf32>
      %18 = arith.mulf %15, %17 : vector<128x128xf32>
      %c0_16 = arith.constant 0 : index
      %c0_17 = arith.constant 0 : index
      %19 = vector.load %arg5[%c0_16, %c0_17] : memref<128x128xf32, #tpu.memory_space<vmem>>, vector<128x128xf32>
      tpu.vector_store %arg5[%c0_16, %c0_17], %18 {strides = array<i32>} : memref<128x128xf32, #tpu.memory_space<vmem>>, vector<128x128xf32>,
    } else {
    }
    return
  }
  func.func @transform_0(%arg0: i32) -> (i32, i32) {
    %c0_i32 = arith.constant 0 : i32
    %c0_i32_0 = arith.constant 0 : i32
    return %arg0, %c0_i32 : i32, i32
  }
  func.func @transform_1(%arg0: i32) -> (i32, i32) {
    %c0_i32 = arith.constant 0 : i32
    %c0_i32_0 = arith.constant 0 : i32
    return %arg0, %c0_i32 : i32, i32
  }
  func.func @transform_2(%arg0: i32) -> (i32, i32) {
    %c0_i32 = arith.constant 0 : i32
    %c0_i32_0 = arith.constant 0 : i32
    %c0_i32_1 = arith.constant 0 : i32
    return %c0_i32, %c0_i32_0 : i32, i32
  }
  func.func @transform_3(%arg0: i32) -> (i32, i32) {
    %c0_i32 = arith.constant 0 : i32
    %c0_i32_0 = arith.constant 0 : i32
    %c0_i32_1 = arith.constant 0 : i32
    return %c0_i32, %c0_i32_0 : i32, i32
  }
  func.func @transform_4(%arg0: i32) -> (i32, i32) {
    %c0_i32 = arith.constant 0 : i32
    %c0_i32_0 = arith.constant 0 : i32
    %c0_i32_1 = arith.constant 0 : i32
    return %c0_i32, %c0_i32_0 : i32, i32
  }
}

module attributes {stable_mosaic.version = 11 : i64} {
  func.func @_node_agg2_kernel(%arg0: i32, %arg1: memref<128x128xbf16, #tpu.memory_space<vmem>>, %arg2: memref<128x1xf32, #tpu.memory_space<vmem>>, %arg3: memref<128x128xf32, #tpu.memory_space<vmem>>, %arg4: memref<1x128xf32, #tpu.memory_space<vmem>>, %arg5: memref<128x128xf32, #tpu.memory_space<vmem>>) attributes {dimension_semantics = [#tpu.dimension_semantics<parallel>], iteration_bounds = array<i64: 2>, scalar_prefetch = 0 : i64, scratch_operands = 0 : i64, tpu.core_type = #tpu.core_type<tc>, window_params = [{transform_indices = @transform_0, window_bounds = array<i64: 128, 128>}, {transform_indices = @transform_1, window_bounds = array<i64: 128, 1>}, {pipeline_mode = #tpu.pipeline_mode<synchronous>, transform_indices = @transform_2, window_bounds = array<i64: 128, 128>}, {pipeline_mode = #tpu.pipeline_mode<synchronous>, transform_indices = @transform_3, window_bounds = array<i64: 1, 128>}, {transform_indices = @transform_4, window_bounds = array<i64: 128, 128>}]} {
    %c0 = arith.constant 0 : index
    %c0_0 = arith.constant 0 : index
    %0 = vector.load %arg1[%c0, %c0_0] : memref<128x128xbf16, #tpu.memory_space<vmem>>, vector<128x128xbf16>
    %c0_1 = arith.constant 0 : index
    %c0_2 = arith.constant 0 : index
    %1 = vector.load %arg3[%c0_1, %c0_2] : memref<128x128xf32, #tpu.memory_space<vmem>>, vector<128x128xf32>
    %2 = arith.truncf %1 : vector<128x128xf32> to vector<128x128xbf16>
    %cst = arith.constant dense<0.000000e+00> : vector<128x128xf32>
    %3 = tpu.matmul %0, %2, %cst {dimension_numbers = #tpu.dot_dimension_numbers<[1], [0], [0], [1], [0, 0, 1, 1], [], []>} : vector<128x128xbf16>, vector<128x128xbf16>, vector<128x128xf32> -> vector<128x128xf32>
    %c0_3 = arith.constant 0 : index
    %c0_4 = arith.constant 0 : index
    %4 = vector.load %arg2[%c0_3, %c0_4] : memref<128x1xf32, #tpu.memory_space<vmem>>, vector<128x1xf32>
    %5 = vector.broadcast %4 : vector<128x1xf32> to vector<128x128xf32>
    %6 = arith.mulf %3, %5 : vector<128x128xf32>
    %c0_5 = arith.constant 0 : index
    %c0_6 = arith.constant 0 : index
    %7 = vector.load %arg4[%c0_5, %c0_6] : memref<1x128xf32, #tpu.memory_space<vmem>>, vector<1x128xf32>
    %8 = vector.broadcast %7 : vector<1x128xf32> to vector<128x128xf32>
    %9 = arith.addf %6, %8 : vector<128x128xf32>
    %c0_7 = arith.constant 0 : index
    %c0_8 = arith.constant 0 : index
    %10 = vector.load %arg5[%c0_7, %c0_8] : memref<128x128xf32, #tpu.memory_space<vmem>>, vector<128x128xf32>
    tpu.vector_store %arg5[%c0_7, %c0_8], %9 {strides = array<i32>} : memref<128x128xf32, #tpu.memory_space<vmem>>, vector<128x128xf32>,
    return
  }
  func.func @transform_0(%arg0: i32) -> (i32, i32) {
    %c0_i32 = arith.constant 0 : i32
    %c0_i32_0 = arith.constant 0 : i32
    return %arg0, %c0_i32 : i32, i32
  }
  func.func @transform_1(%arg0: i32) -> (i32, i32) {
    %c0_i32 = arith.constant 0 : i32
    %c0_i32_0 = arith.constant 0 : i32
    return %arg0, %c0_i32 : i32, i32
  }
  func.func @transform_2(%arg0: i32) -> (i32, i32) {
    %c0_i32 = arith.constant 0 : i32
    %c0_i32_0 = arith.constant 0 : i32
    %c0_i32_1 = arith.constant 0 : i32
    return %c0_i32, %c0_i32_0 : i32, i32
  }
  func.func @transform_3(%arg0: i32) -> (i32, i32) {
    %c0_i32 = arith.constant 0 : i32
    %c0_i32_0 = arith.constant 0 : i32
    %c0_i32_1 = arith.constant 0 : i32
    return %c0_i32, %c0_i32_0 : i32, i32
  }
  func.func @transform_4(%arg0: i32) -> (i32, i32) {
    %c0_i32 = arith.constant 0 : i32
    %c0_i32_0 = arith.constant 0 : i32
    return %arg0, %c0_i32 : i32, i32
  }
}

module attributes {stable_mosaic.version = 11 : i64} {
  func.func @_fused_mid_kernel(%arg0: i32, %arg1: memref<128x128xbf16, #tpu.memory_space<vmem>>, %arg2: memref<128x1xf32, #tpu.memory_space<vmem>>, %arg3: memref<128x128xf32, #tpu.memory_space<vmem>>, %arg4: memref<1x128xf32, #tpu.memory_space<vmem>>, %arg5: memref<128x128xbf16, #tpu.memory_space<vmem>>, %arg6: memref<128x1xf32, #tpu.memory_space<vmem>>, %arg7: memref<128x128xf32, #tpu.memory_space<vmem>>, %arg8: memref<128x128xf32, #tpu.memory_space<vmem>>) attributes {dimension_semantics = [#tpu.dimension_semantics<arbitrary>], iteration_bounds = array<i64: 2>, scalar_prefetch = 0 : i64, scratch_operands = 1 : i64, tpu.core_type = #tpu.core_type<tc>, window_params = [{transform_indices = @transform_0, window_bounds = array<i64: 128, 128>}, {transform_indices = @transform_1, window_bounds = array<i64: 128, 1>}, {pipeline_mode = #tpu.pipeline_mode<synchronous>, transform_indices = @transform_2, window_bounds = array<i64: 128, 128>}, {pipeline_mode = #tpu.pipeline_mode<synchronous>, transform_indices = @transform_3, window_bounds = array<i64: 1, 128>}, {pipeline_mode = #tpu.pipeline_mode<synchronous>, transform_indices = @transform_4, window_bounds = array<i64: 128, 128>}, {pipeline_mode = #tpu.pipeline_mode<synchronous>, transform_indices = @transform_5, window_bounds = array<i64: 128, 1>}, {pipeline_mode = #tpu.pipeline_mode<synchronous>, transform_indices = @transform_6, window_bounds = array<i64: 128, 128>}]} {
    %c0_i32 = arith.constant 0 : i32
    %0 = arith.cmpi eq, %arg0, %c0_i32 : i32
    %1 = arith.extui %0 : i1 to i32
    %c0_i32_0 = arith.constant 0 : i32
    %2 = arith.cmpi ne, %1, %c0_i32_0 : i32
    scf.if %2 {
      %cst_18 = arith.constant 0.000000e+00 : f32
      %26 = vector.broadcast %cst_18 : f32 to vector<128x128xf32>
      %c0_19 = arith.constant 0 : index
      %c0_20 = arith.constant 0 : index
      %27 = vector.load %arg8[%c0_19, %c0_20] : memref<128x128xf32, #tpu.memory_space<vmem>>, vector<128x128xf32>
      tpu.vector_store %arg8[%c0_19, %c0_20], %26 {strides = array<i32>} : memref<128x128xf32, #tpu.memory_space<vmem>>, vector<128x128xf32>,
    } else {
    }
    %c0 = arith.constant 0 : index
    %c0_1 = arith.constant 0 : index
    %3 = vector.load %arg1[%c0, %c0_1] : memref<128x128xbf16, #tpu.memory_space<vmem>>, vector<128x128xbf16>
    %c0_2 = arith.constant 0 : index
    %c0_3 = arith.constant 0 : index
    %4 = vector.load %arg3[%c0_2, %c0_3] : memref<128x128xf32, #tpu.memory_space<vmem>>, vector<128x128xf32>
    %5 = arith.truncf %4 : vector<128x128xf32> to vector<128x128xbf16>
    %cst = arith.constant dense<0.000000e+00> : vector<128x128xf32>
    %6 = tpu.matmul %3, %5, %cst {dimension_numbers = #tpu.dot_dimension_numbers<[1], [0], [0], [1], [0, 0, 1, 1], [], []>} : vector<128x128xbf16>, vector<128x128xbf16>, vector<128x128xf32> -> vector<128x128xf32>
    %c0_4 = arith.constant 0 : index
    %c0_5 = arith.constant 0 : index
    %7 = vector.load %arg2[%c0_4, %c0_5] : memref<128x1xf32, #tpu.memory_space<vmem>>, vector<128x1xf32>
    %8 = vector.broadcast %7 : vector<128x1xf32> to vector<128x128xf32>
    %9 = arith.mulf %6, %8 : vector<128x128xf32>
    %c0_6 = arith.constant 0 : index
    %c0_7 = arith.constant 0 : index
    %10 = vector.load %arg4[%c0_6, %c0_7] : memref<1x128xf32, #tpu.memory_space<vmem>>, vector<1x128xf32>
    %11 = vector.broadcast %10 : vector<1x128xf32> to vector<128x128xf32>
    %12 = arith.addf %9, %11 : vector<128x128xf32>
    %cst_8 = arith.constant 0.000000e+00 : f32
    %13 = vector.broadcast %cst_8 : f32 to vector<128x128xf32>
    %14 = arith.maximumf %12, %13 : vector<128x128xf32>
    %15 = arith.truncf %14 : vector<128x128xf32> to vector<128x128xbf16>
    %c0_9 = arith.constant 0 : index
    %c0_10 = arith.constant 0 : index
    %16 = vector.load %arg5[%c0_9, %c0_10] : memref<128x128xbf16, #tpu.memory_space<vmem>>, vector<128x128xbf16>
    %cst_11 = arith.constant dense<0.000000e+00> : vector<128x128xf32>
    %17 = tpu.matmul %15, %16, %cst_11 {dimension_numbers = #tpu.dot_dimension_numbers<[1], [0], [0], [1], [0, 0, 1, 1], [], []>} : vector<128x128xbf16>, vector<128x128xbf16>, vector<128x128xf32> -> vector<128x128xf32>
    %c0_12 = arith.constant 0 : index
    %c0_13 = arith.constant 0 : index
    %18 = vector.load %arg8[%c0_12, %c0_13] : memref<128x128xf32, #tpu.memory_space<vmem>>, vector<128x128xf32>
    %19 = arith.truncf %17 : vector<128x128xf32> to vector<128x128xbf16>
    %cst_14 = arith.constant dense<0.000000e+00> : vector<128x128xf32>
    %20 = tpu.matmul %3, %19, %cst_14 {dimension_numbers = #tpu.dot_dimension_numbers<[0], [0], [1], [1], [0, 1, 1, 1], [], []>} : vector<128x128xbf16>, vector<128x128xbf16>, vector<128x128xf32> -> vector<128x128xf32>
    %21 = arith.addf %18, %20 : vector<128x128xf32>
    %c0_15 = arith.constant 0 : index
    %c0_16 = arith.constant 0 : index
    %22 = vector.load %arg8[%c0_15, %c0_16] : memref<128x128xf32, #tpu.memory_space<vmem>>, vector<128x128xf32>
    tpu.vector_store %arg8[%c0_15, %c0_16], %21 {strides = array<i32>} : memref<128x128xf32, #tpu.memory_space<vmem>>, vector<128x128xf32>,
    %c1_i32 = arith.constant 1 : i32
    %23 = arith.cmpi eq, %arg0, %c1_i32 : i32
    %24 = arith.extui %23 : i1 to i32
    %c0_i32_17 = arith.constant 0 : i32
    %25 = arith.cmpi ne, %24, %c0_i32_17 : i32
    scf.if %25 {
      %c0_18 = arith.constant 0 : index
      %c0_19 = arith.constant 0 : index
      %26 = vector.load %arg8[%c0_18, %c0_19] : memref<128x128xf32, #tpu.memory_space<vmem>>, vector<128x128xf32>
      %c0_20 = arith.constant 0 : index
      %c0_21 = arith.constant 0 : index
      %27 = vector.load %arg6[%c0_20, %c0_21] : memref<128x1xf32, #tpu.memory_space<vmem>>, vector<128x1xf32>
      %28 = vector.broadcast %27 : vector<128x1xf32> to vector<128x128xf32>
      %29 = arith.mulf %26, %28 : vector<128x128xf32>
      %c0_22 = arith.constant 0 : index
      %c0_23 = arith.constant 0 : index
      %30 = vector.load %arg7[%c0_22, %c0_23] : memref<128x128xf32, #tpu.memory_space<vmem>>, vector<128x128xf32>
      tpu.vector_store %arg7[%c0_22, %c0_23], %29 {strides = array<i32>} : memref<128x128xf32, #tpu.memory_space<vmem>>, vector<128x128xf32>,
    } else {
    }
    return
  }
  func.func @transform_0(%arg0: i32) -> (i32, i32) {
    %c0_i32 = arith.constant 0 : i32
    %c0_i32_0 = arith.constant 0 : i32
    return %arg0, %c0_i32 : i32, i32
  }
  func.func @transform_1(%arg0: i32) -> (i32, i32) {
    %c0_i32 = arith.constant 0 : i32
    %c0_i32_0 = arith.constant 0 : i32
    return %arg0, %c0_i32 : i32, i32
  }
  func.func @transform_2(%arg0: i32) -> (i32, i32) {
    %c0_i32 = arith.constant 0 : i32
    %c0_i32_0 = arith.constant 0 : i32
    %c0_i32_1 = arith.constant 0 : i32
    return %c0_i32, %c0_i32_0 : i32, i32
  }
  func.func @transform_3(%arg0: i32) -> (i32, i32) {
    %c0_i32 = arith.constant 0 : i32
    %c0_i32_0 = arith.constant 0 : i32
    %c0_i32_1 = arith.constant 0 : i32
    return %c0_i32, %c0_i32_0 : i32, i32
  }
  func.func @transform_4(%arg0: i32) -> (i32, i32) {
    %c0_i32 = arith.constant 0 : i32
    %c0_i32_0 = arith.constant 0 : i32
    %c0_i32_1 = arith.constant 0 : i32
    return %c0_i32, %c0_i32_0 : i32, i32
  }
  func.func @transform_5(%arg0: i32) -> (i32, i32) {
    %c0_i32 = arith.constant 0 : i32
    %c0_i32_0 = arith.constant 0 : i32
    %c0_i32_1 = arith.constant 0 : i32
    return %c0_i32, %c0_i32_0 : i32, i32
  }
  func.func @transform_6(%arg0: i32) -> (i32, i32) {
    %c0_i32 = arith.constant 0 : i32
    %c0_i32_0 = arith.constant 0 : i32
    %c0_i32_1 = arith.constant 0 : i32
    return %c0_i32, %c0_i32_0 : i32, i32
  }
}

</mosaic_0001>

<llo_original>
// kernel: hypergraph_forward.5
$region0: #{hypergraph_forward.5}
  #allocation0 [shape = 'u32[]', space=smem, size = 0x4, offset = 0x4, fixed_abs, tag = 'smem constant byte address 0x4 - core index']
  #allocation1 [shape = 'u32[72,128]{1,0:T(1,128)}', space=vmem, size = 0x9000, scoped, tag = 'internal scratch']
  %s0 = inlined_call_operand.vmem [shape: bf16[256,128], index: 0, kind: input, shape index: {}]
  %s1 = inlined_call_operand.vmem [shape: f32[256,1], index: 1, kind: input, shape index: {}]
  %s2 = inlined_call_operand.vmem [shape: f32[128,128], index: 2, kind: input, shape index: {}]
  %s3 = inlined_call_operand.vmem [shape: f32[1,128], index: 3, kind: input, shape index: {}]
  %s4 = inlined_call_operand.hbm [shape: f32[256,128], index: 4, kind: output, shape index: {}]
  %s5 = sld [smem:[#allocation0]]
  $region49: #{hypergraph_forward.5} parent=0
    _
  %s7 = ssub.s32 1, %s5
  %s8 = scalar_select 0, %s7, %s5
  $region1: #{hypergraph_forward.5} parent=0
    #allocation2 [shape = 'u8[131072]{0}', space=vmem, size = 0x20000, scoped, tag = 'output window, operand 0']
    #allocation3 [shape = 's32[2]{0}', space=sflag, size = 0x8, scoped, tag = 'scoped memory for hypergraph_forward.5']
    %9 = vsyncpa [#allocation3], 0
    %s10 = scalar_lea.sflag [#allocation3], 1
    %11 = vsyncpa %s10, 0
    loop: start=0, step=1, limit=4
    $region2: #{hypergraph_forward.5} parent=1 // loop_pre_header
      _
    $region3: #{hypergraph_forward.5} parent=1 // loop_header
      %s13 = sphi 0, %s17
      %p14 = scmp.ge.s32.totalorder %s13, 4
      %s23 = sphi 0, %s25
      %s26 = sphi 0, %s23
      %s27 = sphi 0, %s26
      %s43 = sphi 0, %s27
      %s49 = sphi 0, %s51
      %s52 = sphi 0, %s49
      %s53 = sphi 0, %s52
      %s69 = sphi 0, %s53
      %s73 = sphi 0, %s73
      %s75 = sphi 0, %s73
      %s76 = sphi 0, %s75
      %s90 = sphi 0, %s76
      %s94 = sphi 0, %s94
      %s96 = sphi 0, %s94
      %s97 = sphi 0, %s96
      %s111 = sphi 0, %s97
      %s117 = sphi 0, %s119
      %s120 = sphi 0, %s117
      %s121 = sphi 0, %s120
      %s137 = sphi 0, %s121
    $region4: #{hypergraph_forward.5} parent=1 // loop_header_branch
      %16 = sbr.rel (%p14) target = $region8
    $region5: #{hypergraph_forward.5} parent=1 // loop_body
      %s18 = ssub.s32 %s13, 1
      %s19 = ssub.s32 %s13, 2
      %s20 = sadd.s32 %s13, 1
      %s21 = ssub.s32 %s13, %s20
      %p22 = scmp.eq.s32.totalorder %s21, 0
      %s24 = sadd.s32 %s23, 1
      %s25 = scalar_select %p22, %s23, %s24
      %p28 = pneg %p22
      %p29 = scmp.eq.s32.totalorder %s13, 1
      %p30 = por %p28, %p29
      %p31 = scmp.ne.s32.totalorder %s23, %s26
      %p32 = scmp.eq.s32.totalorder %s13, 0
      %p33 = por %p31, %p32
      %p34 = scmp.ne.s32.totalorder %s23, %s26
      %p35 = scmp.eq.s32.totalorder %s18, 1
      %p36 = por %p34, %p35
      %p37 = scmp.ne.s32.totalorder %s26, %s27
      %p38 = scmp.eq.s32.totalorder %s18, 0
      %p39 = por %p37, %p38
      %p40 = scmp.ne.s32.totalorder %s26, %s27
      %p41 = scmp.eq.s32.totalorder %s19, 1
      %p42 = por %p40, %p41
      %p44 = scmp.ne.s32.totalorder %s27, %s43
      %p45 = scmp.eq.s32.totalorder %s19, 0
      %p46 = por %p44, %p45
      %s47 = ssub.s32 %s13, %s20
      %p48 = scmp.eq.s32.totalorder %s47, 0
      %s50 = sadd.s32 %s49, 1
      %s51 = scalar_select %p48, %s49, %s50
      %p54 = pneg %p48
      %p55 = scmp.eq.s32.totalorder %s13, 1
      %p56 = por %p54, %p55
      %p57 = scmp.ne.s32.totalorder %s49, %s52
      %p58 = scmp.eq.s32.totalorder %s13, 0
      %p59 = por %p57, %p58
      %p60 = scmp.ne.s32.totalorder %s49, %s52
      %p61 = scmp.eq.s32.totalorder %s18, 1
      %p62 = por %p60, %p61
      %p63 = scmp.ne.s32.totalorder %s52, %s53
      %p64 = scmp.eq.s32.totalorder %s18, 0
      %p65 = por %p63, %p64
      %p66 = scmp.ne.s32.totalorder %s52, %s53
      %p67 = scmp.eq.s32.totalorder %s19, 1
      %p68 = por %p66, %p67
      %p70 = scmp.ne.s32.totalorder %s53, %s69
      %p71 = scmp.eq.s32.totalorder %s19, 0
      %p72 = por %p70, %p71
      %s74 = sadd.s32 %s73, 1
      %p77 = scmp.eq.s32.totalorder %s13, 1
      %p78 = scmp.ne.s32.totalorder %s73, %s75
      %p79 = scmp.eq.s32.totalorder %s13, 0
      %p80 = por %p78, %p79
      %p81 = scmp.ne.s32.totalorder %s73, %s75
      %p82 = scmp.eq.s32.totalorder %s18, 1
      %p83 = por %p81, %p82
      %p84 = scmp.ne.s32.totalorder %s75, %s76
      %p85 = scmp.eq.s32.totalorder %s18, 0
      %p86 = por %p84, %p85
      %p87 = scmp.ne.s32.totalorder %s75, %s76
      %p88 = scmp.eq.s32.totalorder %s19, 1
      %p89 = por %p87, %p88
      %p91 = scmp.ne.s32.totalorder %s76, %s90
      %p92 = scmp.eq.s32.totalorder %s19, 0
      %p93 = por %p91, %p92
      %s95 = sadd.s32 %s94, 1
      %p98 = scmp.eq.s32.totalorder %s13, 1
      %p99 = scmp.ne.s32.totalorder %s94, %s96
      %p100 = scmp.eq.s32.totalorder %s13, 0
      %p101 = por %p99, %p100
      %p102 = scmp.ne.s32.totalorder %s94, %s96
      %p103 = scmp.eq.s32.totalorder %s18, 1
      %p104 = por %p102, %p103
      %p105 = scmp.ne.s32.totalorder %s96, %s97
      %p106 = scmp.eq.s32.totalorder %s18, 0
      %p107 = por %p105, %p106
      %p108 = scmp.ne.s32.totalorder %s96, %s97
      %p109 = scmp.eq.s32.totalorder %s19, 1
      %p110 = por %p108, %p109
      %p112 = scmp.ne.s32.totalorder %s97, %s111
      %p113 = scmp.eq.s32.totalorder %s19, 0
      %p114 = por %p112, %p113
      %s115 = ssub.s32 %s13, %s20
      %p116 = scmp.eq.s32.totalorder %s115, 0
      %s118 = sadd.s32 %s117, 1
      %s119 = scalar_select %p116, %s117, %s118
      %p122 = pneg %p116
      %p123 = scmp.eq.s32.totalorder %s13, 1
      %p124 = por %p122, %p123
      %p125 = scmp.ne.s32.totalorder %s117, %s120
      %p126 = scmp.eq.s32.totalorder %s13, 0
      %p127 = por %p125, %p126
      %p128 = scmp.ne.s32.totalorder %s117, %s120
      %p129 = scmp.eq.s32.totalorder %s18, 1
      %p130 = por %p128, %p129
      %p131 = scmp.ne.s32.totalorder %s120, %s121
      %p132 = scmp.eq.s32.totalorder %s18, 0
      %p133 = por %p131, %p132
      %p134 = scmp.ne.s32.totalorder %s120, %s121
      %p135 = scmp.eq.s32.totalorder %s19, 1
      %p136 = por %p134, %p135
      %p138 = scmp.ne.s32.totalorder %s121, %s137
      %p139 = scmp.eq.s32.totalorder %s19, 0
      %p140 = por %p138, %p139
      %p141 = scmp.le.s32.totalorder 1, %s13
      %p142 = scmp.lt.s32.totalorder %s13, 3
      %p143 = pnand %p141, %p142
      %p144 = pneg %p143
      // Predicated region
      $region9: #{hypergraph_forward.5} parent=5 // pred_check
        _
      $region10: #{hypergraph_forward.5} parent=5 // pred_check_branch
        %146 = sbr.rel (%p143) target = $region12
      $region11: #{hypergraph_forward.5} parent=5 // pred_region
        %s147 = ssub.s32 %s13, 1
        // Predicated region
        $region13: #{hypergraph_forward.5} parent=11 // pred_check
          %p148 = pneg %p86
        $region14: #{hypergraph_forward.5} parent=11 // pred_check_branch
          %150 = sbr.rel (%p148) target = $region16
        $region15: #{hypergraph_forward.5} parent=11 // pred_region
          _
        $region16: #{hypergraph_forward.5} parent=11 // pred_fallthru
          _
        // Predicated region
        $region17: #{hypergraph_forward.5} parent=11 // pred_check
          %p151 = pneg %p107
        $region18: #{hypergraph_forward.5} parent=11 // pred_check_branch
          %153 = sbr.rel (%p151) target = $region20
        $region19: #{hypergraph_forward.5} parent=11 // pred_region
          _
        $region20: #{hypergraph_forward.5} parent=11 // pred_fallthru
          _
      $region12: #{hypergraph_forward.5} parent=5 // pred_fallthru
        _
      %p154 = scmp.lt.s32.totalorder %s13, 2
      // Predicated region
      $region21: #{hypergraph_forward.5} parent=5 // pred_check
        %p155 = pneg %p154
      $region22: #{hypergraph_forward.5} parent=5 // pred_check_branch
        %157 = sbr.rel (%p155) target = $region24
      $region23: #{hypergraph_forward.5} parent=5 // pred_region
        // Predicated region
        $region25: #{hypergraph_forward.5} parent=23 // pred_check
          %p158 = pneg %p33
        $region26: #{hypergraph_forward.5} parent=23 // pred_check_branch
          %160 = sbr.rel (%p158) target = $region28
        $region27: #{hypergraph_forward.5} parent=23 // pred_region
          %s161 = smul.u32 16, %s13
          %p162 = scmp.lt.s32.totalorder %s161, 31
          %s163 = scalar_select %p162, %s161, 31
          %s164 = smul.addr %s163, 4
          %s165 = scalar_lea.vmem %s0, %s164
          %s166 = smul.u32 16, %s13
        $region28: #{hypergraph_forward.5} parent=23 // pred_fallthru
          _
        // Predicated region
        $region29: #{hypergraph_forward.5} parent=23 // pred_check
          %p167 = pneg %p59
        $region30: #{hypergraph_forward.5} parent=23 // pred_check_branch
          %169 = sbr.rel (%p167) target = $region32
        $region31: #{hypergraph_forward.5} parent=23 // pred_region
          %s170 = smul.u32 16, %s13
          %p171 = scmp.lt.s32.totalorder %s170, 31
          %s172 = scalar_select %p171, %s170, 31
          %s173 = smul.addr %s172, 8
          %s174 = scalar_lea.vmem %s1, %s173
          %s175 = smul.u32 16, %s13
        $region32: #{hypergraph_forward.5} parent=23 // pred_fallthru
          _
      $region24: #{hypergraph_forward.5} parent=5 // pred_fallthru
        _
      %p176 = scmp.le.s32.totalorder 1, %s13
      %p177 = scmp.lt.s32.totalorder %s13, 3
      %p178 = pnand %p176, %p177
      %p179 = pneg %p178
      // Predicated region
      $region33: #{hypergraph_forward.5} parent=5 // pred_check
        _
      $region34: #{hypergraph_forward.5} parent=5 // pred_check_branch
        %181 = sbr.rel (%p178) target = $region36
      $region35: #{hypergraph_forward.5} parent=5 // pred_region
        %s182 = ssub.s32 %s13, 1
        %s183 = smul.u32 16, %s18
        %p184 = scmp.lt.s32.totalorder %s183, 31
        %s185 = scalar_select %p184, %s183, 31
        %s186 = smul.addr %s185, 4
        %s187 = scalar_lea.vmem %s0, %s186
        %p188 = pneg %p39
        %p189 = pneg %p36
        %s190 = smul.u32 16, %s18
        %p191 = scmp.lt.s32.totalorder %s190, 31
        %s192 = scalar_select %p191, %s190, 31
        %s193 = smul.addr %s192, 8
        %s194 = scalar_lea.vmem %s1, %s193
        %p195 = pneg %p65
        %p196 = pneg %p62
        %p197 = pneg %p86
        %p198 = pneg %p83
        %p199 = pneg %p107
        %p200 = pneg %p104
        %p201 = pneg %p133
        %p202 = pneg %p130
        %s203 = sand.u32 %s120, 1
        %s204 = scalar_lea.sflag [#allocation3], %s203
        %s205 = sand.u32 %s120, 1
        %s206 = smul.addr %s205, 128
        %s207 = scalar_lea.vmem [#allocation2], %s206
        %s208 = smul.u32 16, %s18
        %p209 = scmp.lt.s32.totalorder %s208, 31
        %s210 = scalar_select %p209, %s208, 31
        %s211 = smul.addr %s210, 4
        %s212 = scalar_lea.vmem %s0, %s211
        %s213 = smul.u32 16, %s18
        %s214 = smul.u32 16, %s18
        %p215 = scmp.lt.s32.totalorder %s214, 31
        %s216 = scalar_select %p215, %s214, 31
        %s217 = smul.addr %s216, 8
        %s218 = scalar_lea.vmem %s1, %s217
        %s219 = smul.u32 16, %s18
        %s220 = smul.u32 16, %s18
        %v221 = vld [vmem:[%s212] sm:$0xf]
        %v222 = vld [vmem:[%s212 + $0x4] sm:$0xf]
        %v223 = vld [vmem:[%s212 + $0x8] sm:$0xf]
        %v224 = vld [vmem:[%s212 + $0xc] sm:$0xf]
        %v225 = vld [vmem:[%s212 + $0x10] sm:$0xf]
        %v226 = vld [vmem:[%s212 + $0x14] sm:$0xf]
        %v227 = vld [vmem:[%s212 + $0x18] sm:$0xf]
        %v228 = vld [vmem:[%s212 + $0x1c] sm:$0xf]
        %v229 = vld [vmem:[%s212 + $0x20] sm:$0xf]
        %v230 = vld [vmem:[%s212 + $0x24] sm:$0xf]
        %v231 = vld [vmem:[%s212 + $0x28] sm:$0xf]
        %v232 = vld [vmem:[%s212 + $0x2c] sm:$0xf]
        %v233 = vld [vmem:[%s212 + $0x30] sm:$0xf]
        %v234 = vld [vmem:[%s212 + $0x34] sm:$0xf]
        %v235 = vld [vmem:[%s212 + $0x38] sm:$0xf]
        %v236 = vld [vmem:[%s212 + $0x3c] sm:$0xf]
        %v237 = vld [vmem:[%s2] sm:$0xff]
        %v238 = vld [vmem:[%s2 + $0x8] sm:$0xff]
        %v239 = vld [vmem:[%s2 + $0x10] sm:$0xff]
        %v240 = vld [vmem:[%s2 + $0x18] sm:$0xff]
        %v241 = vld [vmem:[%s2 + $0x20] sm:$0xff]
        %v242 = vld [vmem:[%s2 + $0x28] sm:$0xff]
        %v243 = vld [vmem:[%s2 + $0x30] sm:$0xff]
        %v244 = vld [vmem:[%s2 + $0x38] sm:$0xff]
        %v245 = vld [vmem:[%s2 + $0x40] sm:$0xff]
        %v246 = vld [vmem:[%s2 + $0x48] sm:$0xff]
        %v247 = vld [vmem:[%s2 + $0x50] sm:$0xff]
        %v248 = vld [vmem:[%s2 + $0x58] sm:$0xff]
        %v249 = vld [vmem:[%s2 + $0x60] sm:$0xff]
        %v250 = vld [vmem:[%s2 + $0x68] sm:$0xff]
        %v251 = vld [vmem:[%s2 + $0x70] sm:$0xff]
        %v252 = vld [vmem:[%s2 + $0x78] sm:$0xff]
        %v253 = vpack.c.bf16 %v238, %v237
        %v254 = vpack.c.bf16 %v240, %v239
        %v255 = vpack.c.bf16 %v242, %v241
        %v256 = vpack.c.bf16 %v244, %v243
        %v257 = vpack.c.bf16 %v246, %v245
        %v258 = vpack.c.bf16 %v248, %v247
        %v259 = vpack.c.bf16 %v250, %v249
        %v260 = vpack.c.bf16 %v252, %v251
        %v277 = vunpack.c.l.b16 %v221
        %v278 = vunpack.c.l.b16 %v222
        %v279 = vunpack.c.l.b16 %v223
        %v280 = vunpack.c.l.b16 %v224
        %v281 = vunpack.c.l.b16 %v225
        %v282 = vunpack.c.l.b16 %v226
        %v283 = vunpack.c.l.b16 %v227
        %v284 = vunpack.c.l.b16 %v228
        %v285 = vunpack.c.l.b16 %v229
        %v286 = vunpack.c.l.b16 %v230
        %v287 = vunpack.c.l.b16 %v231
        %v288 = vunpack.c.l.b16 %v232
        %v289 = vunpack.c.l.b16 %v233
        %v290 = vunpack.c.l.b16 %v234
        %v291 = vunpack.c.l.b16 %v235
        %v292 = vunpack.c.l.b16 %v236
        %v293 = vpack.c.b16 %v278, %v277
        %v294 = vpack.c.b16 %v280, %v279
        %v295 = vpack.c.b16 %v282, %v281
        %v296 = vpack.c.b16 %v284, %v283
        %v297 = vpack.c.b16 %v286, %v285
        %v298 = vpack.c.b16 %v288, %v287
        %v299 = vpack.c.b16 %v290, %v289
        %v300 = vpack.c.b16 %v292, %v291
        %309 = vmatpush.bf16.msra.mxu0 %v260
        %310 = vmatpush.bf16.msra.mxu0 %v259
        %311 = vmatpush.bf16.msra.mxu0 %v258
        %312 = vmatpush.bf16.msra.mxu0 %v257
        %313 = vmatpush.bf16.msra.mxu0 %v256
        %314 = vmatpush.bf16.msra.mxu0 %v255
        %315 = vmatpush.bf16.msra.mxu0 %v254
        %316 = vmatpush.bf16.msra.mxu0 %v253
        %317 = vmatmul.bf16.gmra.mxu0 %v293
        %v318 = vpop.f32.mrf.mxu0
        %v319 = vadd.f32 0.0, %v318
        %v320 = vpop.f32.mrf.mxu0
        %v321 = vadd.f32 0.0, %v320
        %322 = vmatmul.bf16.gmra.mxu0 %v294
        %v323 = vpop.f32.mrf.mxu0
        %v324 = vadd.f32 0.0, %v323
        %v325 = vpop.f32.mrf.mxu0
        %v326 = vadd.f32 0.0, %v325
        %327 = vmatmul.bf16.gmra.mxu0 %v295
        %v328 = vpop.f32.mrf.mxu0
        %v329 = vadd.f32 0.0, %v328
        %v330 = vpop.f32.mrf.mxu0
        %v331 = vadd.f32 0.0, %v330
        %332 = vmatmul.bf16.gmra.mxu0 %v296
        %v333 = vpop.f32.mrf.mxu0
        %v334 = vadd.f32 0.0, %v333
        %v335 = vpop.f32.mrf.mxu0
        %v336 = vadd.f32 0.0, %v335
        %337 = vmatmul.bf16.gmra.mxu0 %v297
        %v338 = vpop.f32.mrf.mxu0
        %v339 = vadd.f32 0.0, %v338
        %v340 = vpop.f32.mrf.mxu0
        %v341 = vadd.f32 0.0, %v340
        %342 = vmatmul.bf16.gmra.mxu0 %v298
        %v343 = vpop.f32.mrf.mxu0
        %v344 = vadd.f32 0.0, %v343
        %v345 = vpop.f32.mrf.mxu0
        %v346 = vadd.f32 0.0, %v345
        %347 = vmatmul.bf16.gmra.mxu0 %v299
        %v348 = vpop.f32.mrf.mxu0
        %v349 = vadd.f32 0.0, %v348
        %v350 = vpop.f32.mrf.mxu0
        %v351 = vadd.f32 0.0, %v350
        %352 = vmatmul.bf16.gmra.mxu0 %v300
        %v353 = vpop.f32.mrf.mxu0
        %v354 = vadd.f32 0.0, %v353
        %v355 = vpop.f32.mrf.mxu0
        %v356 = vadd.f32 0.0, %v355
        %357 = vdwg.mxu0
        %v358 = vld [vmem:[%s218] sm:$0xff]
        %v359 = vld [vmem:[%s218 + $0x8] sm:$0xff]
        %v360 = vld [vmem:[%s218 + $0x10] sm:$0xff]
        %v361 = vld [vmem:[%s218 + $0x18] sm:$0xff]
        %v362 = vld [vmem:[%s218 + $0x20] sm:$0xff]
        %v363 = vld [vmem:[%s218 + $0x28] sm:$0xff]
        %v364 = vld [vmem:[%s218 + $0x30] sm:$0xff]
        %v365 = vld [vmem:[%s218 + $0x38] sm:$0xff]
        %v366 = vld [vmem:[%s218 + $0x40] sm:$0xff]
        %v367 = vld [vmem:[%s218 + $0x48] sm:$0xff]
        %v368 = vld [vmem:[%s218 + $0x50] sm:$0xff]
        %v369 = vld [vmem:[%s218 + $0x58] sm:$0xff]
        %v370 = vld [vmem:[%s218 + $0x60] sm:$0xff]
        %v371 = vld [vmem:[%s218 + $0x68] sm:$0xff]
        %v372 = vld [vmem:[%s218 + $0x70] sm:$0xff]
        %v373 = vld [vmem:[%s218 + $0x78] sm:$0xff]
        %375 = vset.pattern.permute.xlu0 0
        %376 = vperm.xlu0 %375, %v358
        %v377 = vpop.permute.xlu0 %376
        %380 = vset.pattern.permute.xlu0 0
        %381 = vperm.xlu0 %380, %v359
        %v382 = vpop.permute.xlu0 %381
        %385 = vset.pattern.permute.xlu0 0
        %386 = vperm.xlu0 %385, %v360
        %v387 = vpop.permute.xlu0 %386
        %390 = vset.pattern.permute.xlu0 0
        %391 = vperm.xlu0 %390, %v361
        %v392 = vpop.permute.xlu0 %391
        %395 = vset.pattern.permute.xlu0 0
        %396 = vperm.xlu0 %395, %v362
        %v397 = vpop.permute.xlu0 %396
        %400 = vset.pattern.permute.xlu0 0
        %401 = vperm.xlu0 %400, %v363
        %v402 = vpop.permute.xlu0 %401
        %405 = vset.pattern.permute.xlu0 0
        %406 = vperm.xlu0 %405, %v364
        %v407 = vpop.permute.xlu0 %406
        %410 = vset.pattern.permute.xlu0 0
        %411 = vperm.xlu0 %410, %v365
        %v412 = vpop.permute.xlu0 %411
        %415 = vset.pattern.permute.xlu0 0
        %416 = vperm.xlu0 %415, %v366
        %v417 = vpop.permute.xlu0 %416
        %420 = vset.pattern.permute.xlu0 0
        %421 = vperm.xlu0 %420, %v367
        %v422 = vpop.permute.xlu0 %421
        %425 = vset.pattern.permute.xlu0 0
        %426 = vperm.xlu0 %425, %v368
        %v427 = vpop.permute.xlu0 %426
        %430 = vset.pattern.permute.xlu0 0
        %431 = vperm.xlu0 %430, %v369
        %v432 = vpop.permute.xlu0 %431
        %435 = vset.pattern.permute.xlu0 0
        %436 = vperm.xlu0 %435, %v370
        %v437 = vpop.permute.xlu0 %436
        %440 = vset.pattern.permute.xlu0 0
        %441 = vperm.xlu0 %440, %v371
        %v442 = vpop.permute.xlu0 %441
        %445 = vset.pattern.permute.xlu0 0
        %446 = vperm.xlu0 %445, %v372
        %v447 = vpop.permute.xlu0 %446
        %450 = vset.pattern.permute.xlu0 0
        %451 = vperm.xlu0 %450, %v373
        %v452 = vpop.permute.xlu0 %451
        %v454 = vmul.f32 %v319, %v377
        %v455 = vmul.f32 %v321, %v382
        %v456 = vmul.f32 %v324, %v387
        %v457 = vmul.f32 %v326, %v392
        %v458 = vmul.f32 %v329, %v397
        %v459 = vmul.f32 %v331, %v402
        %v460 = vmul.f32 %v334, %v407
        %v461 = vmul.f32 %v336, %v412
        %v462 = vmul.f32 %v339, %v417
        %v463 = vmul.f32 %v341, %v422
        %v464 = vmul.f32 %v344, %v427
        %v465 = vmul.f32 %v346, %v432
        %v466 = vmul.f32 %v349, %v437
        %v467 = vmul.f32 %v351, %v442
        %v468 = vmul.f32 %v354, %v447
        %v469 = vmul.f32 %v356, %v452
        %v470 = vld [vmem:[%s3] sm:$0x1]
        %v472 = vperm.slane %v470, 0
        %v474 = vadd.f32 %v454, %v472
        %v475 = vadd.f32 %v455, %v472
        %v476 = vadd.f32 %v456, %v472
        %v477 = vadd.f32 %v457, %v472
        %v478 = vadd.f32 %v458, %v472
        %v479 = vadd.f32 %v459, %v472
        %v480 = vadd.f32 %v460, %v472
        %v481 = vadd.f32 %v461, %v472
        %v482 = vadd.f32 %v462, %v472
        %v483 = vadd.f32 %v463, %v472
        %v484 = vadd.f32 %v464, %v472
        %v485 = vadd.f32 %v465, %v472
        %v486 = vadd.f32 %v466, %v472
        %v487 = vadd.f32 %v467, %v472
        %v488 = vadd.f32 %v468, %v472
        %v489 = vadd.f32 %v469, %v472
        %490 = vst [vmem:[%s207] sm:$0xff] %v474
        %491 = vst [vmem:[%s207 + $0x8] sm:$0xff] %v475
        %492 = vst [vmem:[%s207 + $0x10] sm:$0xff] %v476
        %493 = vst [vmem:[%s207 + $0x18] sm:$0xff] %v477
        %494 = vst [vmem:[%s207 + $0x20] sm:$0xff] %v478
        %495 = vst [vmem:[%s207 + $0x28] sm:$0xff] %v479
        %496 = vst [vmem:[%s207 + $0x30] sm:$0xff] %v480
        %497 = vst [vmem:[%s207 + $0x38] sm:$0xff] %v481
        %498 = vst [vmem:[%s207 + $0x40] sm:$0xff] %v482
        %499 = vst [vmem:[%s207 + $0x48] sm:$0xff] %v483
        %500 = vst [vmem:[%s207 + $0x50] sm:$0xff] %v484
        %501 = vst [vmem:[%s207 + $0x58] sm:$0xff] %v485
        %502 = vst [vmem:[%s207 + $0x60] sm:$0xff] %v486
        %503 = vst [vmem:[%s207 + $0x68] sm:$0xff] %v487
        %504 = vst [vmem:[%s207 + $0x70] sm:$0xff] %v488
        %505 = vst [vmem:[%s207 + $0x78] sm:$0xff] %v489
        %s506 = sand.u32 %s120, 1
        %s507 = scalar_lea.sflag [#allocation3], %s506
        %s508 = sand.u32 %s120, 1
        %s509 = smul.addr %s508, 128
        %s510 = scalar_lea.vmem [#allocation2], %s509
        // Predicated region
        $region37: #{hypergraph_forward.5} parent=35 // pred_check
          %p511 = pneg %p130
        $region38: #{hypergraph_forward.5} parent=35 // pred_check_branch
          %513 = sbr.rel (%p511) target = $region40
        $region39: #{hypergraph_forward.5} parent=35 // pred_region
          %s514 = smul.u32 16, %s18
          %516 = vsyncadd %s507, 0
          %s517 = smul.addr %s514, 8
          %s518 = scalar_lea.hbm %s4, %s517
          %s519 = sshll.u32 %s510, 4
          %s520 = int_to_ptr.vmem [resolvable:$true] %s519
          %s521 = sshll.u32 %s518, 4
          %s522 = int_to_ptr.hbm [resolvable:$true] %s521
          %527 = dma.vmem_to_hbm [thread:$0]  %s520, 2048, %s522, %s507, 128, 128, 8
        $region40: #{hypergraph_forward.5} parent=35 // pred_fallthru
          _
      $region36: #{hypergraph_forward.5} parent=5 // pred_fallthru
        _
      %p528 = scmp.le.s32.totalorder 2, %s13
      // Predicated region
      $region41: #{hypergraph_forward.5} parent=5 // pred_check
        %p529 = pneg %p528
      $region42: #{hypergraph_forward.5} parent=5 // pred_check_branch
        %531 = sbr.rel (%p529) target = $region44
      $region43: #{hypergraph_forward.5} parent=5 // pred_region
        %s532 = ssub.s32 %s13, 2
        // Predicated region
        $region45: #{hypergraph_forward.5} parent=43 // pred_check
          %p533 = pneg %p136
        $region46: #{hypergraph_forward.5} parent=43 // pred_check_branch
          %535 = sbr.rel (%p533) target = $region48
        $region47: #{hypergraph_forward.5} parent=43 // pred_region
          %s536 = sand.u32 %s121, 1
          %s537 = scalar_lea.sflag [#allocation3], %s536
          %s538 = sand.u32 %s121, 1
          %s539 = smul.addr %s538, 128
          %s540 = scalar_lea.vmem [#allocation2], %s539
          %542 = dma.done %s537, 2048
        $region48: #{hypergraph_forward.5} parent=43 // pred_fallthru
          _
      $region44: #{hypergraph_forward.5} parent=5 // pred_fallthru
        _
    $region6: #{hypergraph_forward.5} parent=1 // loop_footer
      %s17 = sadd.s32 1, %s13
    $region7: #{hypergraph_forward.5} parent=1 // loop_footer_branch
      %12 = sbr.rel target = $region3
    $region8: #{hypergraph_forward.5} parent=1 // loop_exit
      _
    %543 = vsyncpa [#allocation3], 1
    %s544 = scalar_lea.sflag [#allocation3], 1
    %545 = vsyncpa %s544, 1

// kernel: hypergraph_forward.3
$region0: #{hypergraph_forward.3}
  #allocation0 [shape = 'u32[]', space=smem, size = 0x4, offset = 0x4, fixed_abs, tag = 'smem constant byte address 0x4 - core index']
  #allocation1 [shape = 'u32[72,128]{1,0:T(1,128)}', space=vmem, size = 0x9000, scoped, tag = 'internal scratch']
  #allocation2 [shape = 'f32[128,128]{1,0:T(8,128)}', space=vmem, size = 0x10000, scoped, tag = 'scratch operand']
  %s0 = inlined_call_operand.vmem [shape: bf16[256,128], index: 0, kind: input, shape index: {}]
  %s1 = inlined_call_operand.vmem [shape: bf16[256,128], index: 1, kind: input, shape index: {}]
  %s2 = inlined_call_operand.vmem [shape: bf16[128,128], index: 2, kind: input, shape index: {}]
  %s3 = inlined_call_operand.vmem [shape: f32[128,1], index: 3, kind: input, shape index: {}]
  %s4 = inlined_call_operand.vmem [shape: f32[128,128], index: 4, kind: output, shape index: {}]
  %s5 = sld [smem:[#allocation0]]
  $region57: #{hypergraph_forward.3} parent=0
    _
  %s7 = ssub.s32 1, %s5
  %s8 = scalar_select 0, %s7, %s5
  loop: start=0, step=1, limit=4
  $region2: #{hypergraph_forward.3} parent=0 // loop_pre_header
    _
  $region3: #{hypergraph_forward.3} parent=0 // loop_header
    %s10 = sphi 0, %s14
    %p11 = scmp.ge.s32.totalorder %s10, 4
    %s20 = sphi 0, %s22
    %s23 = sphi 0, %s20
    %s24 = sphi 0, %s23
    %s40 = sphi 0, %s24
    %s46 = sphi 0, %s48
    %s49 = sphi 0, %s46
    %s50 = sphi 0, %s49
    %s66 = sphi 0, %s50
    %s70 = sphi 0, %s70
    %s72 = sphi 0, %s70
    %s73 = sphi 0, %s72
    %s87 = sphi 0, %s73
    %s91 = sphi 0, %s91
    %s93 = sphi 0, %s91
    %s94 = sphi 0, %s93
    %s108 = sphi 0, %s94
    %s112 = sphi 0, %s112
    %s114 = sphi 0, %s112
    %s115 = sphi 0, %s114
    %s129 = sphi 0, %s115
  $region4: #{hypergraph_forward.3} parent=0 // loop_header_branch
    %13 = sbr.rel (%p11) target = $region8
  $region5: #{hypergraph_forward.3} parent=0 // loop_body
    %s15 = ssub.s32 %s10, 1
    %s16 = ssub.s32 %s10, 2
    %s17 = sadd.s32 %s10, 1
    %s18 = ssub.s32 %s10, %s17
    %p19 = scmp.eq.s32.totalorder %s18, 0
    %s21 = sadd.s32 %s20, 1
    %s22 = scalar_select %p19, %s20, %s21
    %p25 = pneg %p19
    %p26 = scmp.eq.s32.totalorder %s10, 1
    %p27 = por %p25, %p26
    %p28 = scmp.ne.s32.totalorder %s20, %s23
    %p29 = scmp.eq.s32.totalorder %s10, 0
    %p30 = por %p28, %p29
    %p31 = scmp.ne.s32.totalorder %s20, %s23
    %p32 = scmp.eq.s32.totalorder %s15, 1
    %p33 = por %p31, %p32
    %p34 = scmp.ne.s32.totalorder %s23, %s24
    %p35 = scmp.eq.s32.totalorder %s15, 0
    %p36 = por %p34, %p35
    %p37 = scmp.ne.s32.totalorder %s23, %s24
    %p38 = scmp.eq.s32.totalorder %s16, 1
    %p39 = por %p37, %p38
    %p41 = scmp.ne.s32.totalorder %s24, %s40
    %p42 = scmp.eq.s32.totalorder %s16, 0
    %p43 = por %p41, %p42
    %s44 = ssub.s32 %s10, %s17
    %p45 = scmp.eq.s32.totalorder %s44, 0
    %s47 = sadd.s32 %s46, 1
    %s48 = scalar_select %p45, %s46, %s47
    %p51 = pneg %p45
    %p52 = scmp.eq.s32.totalorder %s10, 1
    %p53 = por %p51, %p52
    %p54 = scmp.ne.s32.totalorder %s46, %s49
    %p55 = scmp.eq.s32.totalorder %s10, 0
    %p56 = por %p54, %p55
    %p57 = scmp.ne.s32.totalorder %s46, %s49
    %p58 = scmp.eq.s32.totalorder %s15, 1
    %p59 = por %p57, %p58
    %p60 = scmp.ne.s32.totalorder %s49, %s50
    %p61 = scmp.eq.s32.totalorder %s15, 0
    %p62 = por %p60, %p61
    %p63 = scmp.ne.s32.totalorder %s49, %s50
    %p64 = scmp.eq.s32.totalorder %s16, 1
    %p65 = por %p63, %p64
    %p67 = scmp.ne.s32.totalorder %s50, %s66
    %p68 = scmp.eq.s32.totalorder %s16, 0
    %p69 = por %p67, %p68
    %s71 = sadd.s32 %s70, 1
    %p74 = scmp.eq.s32.totalorder %s10, 1
    %p75 = scmp.ne.s32.totalorder %s70, %s72
    %p76 = scmp.eq.s32.totalorder %s10, 0
    %p77 = por %p75, %p76
    %p78 = scmp.ne.s32.totalorder %s70, %s72
    %p79 = scmp.eq.s32.totalorder %s15, 1
    %p80 = por %p78, %p79
    %p81 = scmp.ne.s32.totalorder %s72, %s73
    %p82 = scmp.eq.s32.totalorder %s15, 0
    %p83 = por %p81, %p82
    %p84 = scmp.ne.s32.totalorder %s72, %s73
    %p85 = scmp.eq.s32.totalorder %s16, 1
    %p86 = por %p84, %p85
    %p88 = scmp.ne.s32.totalorder %s73, %s87
    %p89 = scmp.eq.s32.totalorder %s16, 0
    %p90 = por %p88, %p89
    %s92 = sadd.s32 %s91, 1
    %p95 = scmp.eq.s32.totalorder %s10, 1
    %p96 = scmp.ne.s32.totalorder %s91, %s93
    %p97 = scmp.eq.s32.totalorder %s10, 0
    %p98 = por %p96, %p97
    %p99 = scmp.ne.s32.totalorder %s91, %s93
    %p100 = scmp.eq.s32.totalorder %s15, 1
    %p101 = por %p99, %p100
    %p102 = scmp.ne.s32.totalorder %s93, %s94
    %p103 = scmp.eq.s32.totalorder %s15, 0
    %p104 = por %p102, %p103
    %p105 = scmp.ne.s32.totalorder %s93, %s94
    %p106 = scmp.eq.s32.totalorder %s16, 1
    %p107 = por %p105, %p106
    %p109 = scmp.ne.s32.totalorder %s94, %s108
    %p110 = scmp.eq.s32.totalorder %s16, 0
    %p111 = por %p109, %p110
    %s113 = sadd.s32 %s112, 1
    %p116 = scmp.eq.s32.totalorder %s10, 1
    %p117 = scmp.ne.s32.totalorder %s112, %s114
    %p118 = scmp.eq.s32.totalorder %s10, 0
    %p119 = por %p117, %p118
    %p120 = scmp.ne.s32.totalorder %s112, %s114
    %p121 = scmp.eq.s32.totalorder %s15, 1
    %p122 = por %p120, %p121
    %p123 = scmp.ne.s32.totalorder %s114, %s115
    %p124 = scmp.eq.s32.totalorder %s15, 0
    %p125 = por %p123, %p124
    %p126 = scmp.ne.s32.totalorder %s114, %s115
    %p127 = scmp.eq.s32.totalorder %s16, 1
    %p128 = por %p126, %p127
    %p130 = scmp.ne.s32.totalorder %s115, %s129
    %p131 = scmp.eq.s32.totalorder %s16, 0
    %p132 = por %p130, %p131
    %p133 = scmp.le.s32.totalorder 1, %s10
    %p134 = scmp.lt.s32.totalorder %s10, 3
    %p135 = pnand %p133, %p134
    %p136 = pneg %p135
    // Predicated region
    $region9: #{hypergraph_forward.3} parent=5 // pred_check
      _
    $region10: #{hypergraph_forward.3} parent=5 // pred_check_branch
      %138 = sbr.rel (%p135) target = $region12
    $region11: #{hypergraph_forward.3} parent=5 // pred_region
      %s139 = ssub.s32 %s10, 1
      // Predicated region
      $region13: #{hypergraph_forward.3} parent=11 // pred_check
        %p140 = pneg %p83
      $region14: #{hypergraph_forward.3} parent=11 // pred_check_branch
        %142 = sbr.rel (%p140) target = $region16
      $region15: #{hypergraph_forward.3} parent=11 // pred_region
        _
      $region16: #{hypergraph_forward.3} parent=11 // pred_fallthru
        _
      // Predicated region
      $region17: #{hypergraph_forward.3} parent=11 // pred_check
        %p143 = pneg %p104
      $region18: #{hypergraph_forward.3} parent=11 // pred_check_branch
        %145 = sbr.rel (%p143) target = $region20
      $region19: #{hypergraph_forward.3} parent=11 // pred_region
        _
      $region20: #{hypergraph_forward.3} parent=11 // pred_fallthru
        _
    $region12: #{hypergraph_forward.3} parent=5 // pred_fallthru
      _
    %p146 = scmp.lt.s32.totalorder %s10, 2
    // Predicated region
    $region21: #{hypergraph_forward.3} parent=5 // pred_check
      %p147 = pneg %p146
    $region22: #{hypergraph_forward.3} parent=5 // pred_check_branch
      %149 = sbr.rel (%p147) target = $region24
    $region23: #{hypergraph_forward.3} parent=5 // pred_region
      // Predicated region
      $region25: #{hypergraph_forward.3} parent=23 // pred_check
        %p150 = pneg %p30
      $region26: #{hypergraph_forward.3} parent=23 // pred_check_branch
        %152 = sbr.rel (%p150) target = $region28
      $region27: #{hypergraph_forward.3} parent=23 // pred_region
        %s153 = smul.u32 16, %s10
        %p154 = scmp.lt.s32.totalorder %s153, 31
        %s155 = scalar_select %p154, %s153, 31
        %s156 = smul.addr %s155, 4
        %s157 = scalar_lea.vmem %s0, %s156
        %s158 = smul.u32 16, %s10
      $region28: #{hypergraph_forward.3} parent=23 // pred_fallthru
        _
      // Predicated region
      $region29: #{hypergraph_forward.3} parent=23 // pred_check
        %p159 = pneg %p56
      $region30: #{hypergraph_forward.3} parent=23 // pred_check_branch
        %161 = sbr.rel (%p159) target = $region32
      $region31: #{hypergraph_forward.3} parent=23 // pred_region
        %s162 = smul.u32 16, %s10
        %p163 = scmp.lt.s32.totalorder %s162, 31
        %s164 = scalar_select %p163, %s162, 31
        %s165 = smul.addr %s164, 4
        %s166 = scalar_lea.vmem %s1, %s165
        %s167 = smul.u32 16, %s10
      $region32: #{hypergraph_forward.3} parent=23 // pred_fallthru
        _
    $region24: #{hypergraph_forward.3} parent=5 // pred_fallthru
      _
    %p168 = scmp.le.s32.totalorder 1, %s10
    %p169 = scmp.lt.s32.totalorder %s10, 3
    %p170 = pnand %p168, %p169
    %p171 = pneg %p170
    // Predicated region
    $region33: #{hypergraph_forward.3} parent=5 // pred_check
      _
    $region34: #{hypergraph_forward.3} parent=5 // pred_check_branch
      %173 = sbr.rel (%p170) target = $region36
    $region35: #{hypergraph_forward.3} parent=5 // pred_region
      %s174 = ssub.s32 %s10, 1
      %s175 = smul.u32 16, %s15
      %p176 = scmp.lt.s32.totalorder %s175, 31
      %s177 = scalar_select %p176, %s175, 31
      %s178 = smul.addr %s177, 4
      %s179 = scalar_lea.vmem %s0, %s178
      %p180 = pneg %p36
      %p181 = pneg %p33
      %s182 = smul.u32 16, %s15
      %p183 = scmp.lt.s32.totalorder %s182, 31
      %s184 = scalar_select %p183, %s182, 31
      %s185 = smul.addr %s184, 4
      %s186 = scalar_lea.vmem %s1, %s185
      %p187 = pneg %p62
      %p188 = pneg %p59
      %p189 = pneg %p83
      %p190 = pneg %p80
      %p191 = pneg %p104
      %p192 = pneg %p101
      %p193 = pneg %p125
      %p194 = pneg %p122
      %s195 = smul.u32 16, %s15
      %p196 = scmp.lt.s32.totalorder %s195, 31
      %s197 = scalar_select %p196, %s195, 31
      %s198 = smul.addr %s197, 4
      %s199 = scalar_lea.vmem %s0, %s198
      %s200 = smul.u32 16, %s15
      %s201 = smul.u32 16, %s15
      %p202 = scmp.lt.s32.totalorder %s201, 31
      %s203 = scalar_select %p202, %s201, 31
      %s204 = smul.addr %s203, 4
      %s205 = scalar_lea.vmem %s1, %s204
      %s206 = smul.u32 16, %s15
      %p207 = scmp.eq.s32.totalorder %s15, 0
      // Predicated region
      $region37: #{hypergraph_forward.3} parent=35 // pred_check
        %p208 = pneg %p207
      $region38: #{hypergraph_forward.3} parent=35 // pred_check_branch
        %210 = sbr.rel (%p208) target = $region40
      $region39: #{hypergraph_forward.3} parent=35 // pred_region
        %211 = vst [vmem:[#allocation2] sm:$0xff] 0.0
        %212 = vst [vmem:[#allocation2 + $0x8] sm:$0xff] 0.0
        %213 = vst [vmem:[#allocation2 + $0x10] sm:$0xff] 0.0
        %214 = vst [vmem:[#allocation2 + $0x18] sm:$0xff] 0.0
        %215 = vst [vmem:[#allocation2 + $0x20] sm:$0xff] 0.0
        %216 = vst [vmem:[#allocation2 + $0x28] sm:$0xff] 0.0
        %217 = vst [vmem:[#allocation2 + $0x30] sm:$0xff] 0.0
        %218 = vst [vmem:[#allocation2 + $0x38] sm:$0xff] 0.0
        %219 = vst [vmem:[#allocation2 + $0x40] sm:$0xff] 0.0
        %220 = vst [vmem:[#allocation2 + $0x48] sm:$0xff] 0.0
        %221 = vst [vmem:[#allocation2 + $0x50] sm:$0xff] 0.0
        %222 = vst [vmem:[#allocation2 + $0x58] sm:$0xff] 0.0
        %223 = vst [vmem:[#allocation2 + $0x60] sm:$0xff] 0.0
        %224 = vst [vmem:[#allocation2 + $0x68] sm:$0xff] 0.0
        %225 = vst [vmem:[#allocation2 + $0x70] sm:$0xff] 0.0
        %226 = vst [vmem:[#allocation2 + $0x78] sm:$0xff] 0.0
      $region40: #{hypergraph_forward.3} parent=35 // pred_fallthru
        _
      %v227 = vld [vmem:[%s205] sm:$0xf]
      %v228 = vld [vmem:[%s205 + $0x4] sm:$0xf]
      %v229 = vld [vmem:[%s205 + $0x8] sm:$0xf]
      %v230 = vld [vmem:[%s205 + $0xc] sm:$0xf]
      %v231 = vld [vmem:[%s205 + $0x10] sm:$0xf]
      %v232 = vld [vmem:[%s205 + $0x14] sm:$0xf]
      %v233 = vld [vmem:[%s205 + $0x18] sm:$0xf]
      %v234 = vld [vmem:[%s205 + $0x1c] sm:$0xf]
      %v235 = vld [vmem:[%s205 + $0x20] sm:$0xf]
      %v236 = vld [vmem:[%s205 + $0x24] sm:$0xf]
      %v237 = vld [vmem:[%s205 + $0x28] sm:$0xf]
      %v238 = vld [vmem:[%s205 + $0x2c] sm:$0xf]
      %v239 = vld [vmem:[%s205 + $0x30] sm:$0xf]
      %v240 = vld [vmem:[%s205 + $0x34] sm:$0xf]
      %v241 = vld [vmem:[%s205 + $0x38] sm:$0xf]
      %v242 = vld [vmem:[%s205 + $0x3c] sm:$0xf]
      %v243 = vld [vmem:[%s2] sm:$0xf]
      %v244 = vld [vmem:[%s2 + $0x4] sm:$0xf]
      %v245 = vld [vmem:[%s2 + $0x8] sm:$0xf]
      %v246 = vld [vmem:[%s2 + $0xc] sm:$0xf]
      %v247 = vld [vmem:[%s2 + $0x10] sm:$0xf]
      %v248 = vld [vmem:[%s2 + $0x14] sm:$0xf]
      %v249 = vld [vmem:[%s2 + $0x18] sm:$0xf]
      %v250 = vld [vmem:[%s2 + $0x1c] sm:$0xf]
      %v251 = vld [vmem:[%s2 + $0x20] sm:$0xf]
      %v252 = vld [vmem:[%s2 + $0x24] sm:$0xf]
      %v253 = vld [vmem:[%s2 + $0x28] sm:$0xf]
      %v254 = vld [vmem:[%s2 + $0x2c] sm:$0xf]
      %v255 = vld [vmem:[%s2 + $0x30] sm:$0xf]
      %v256 = vld [vmem:[%s2 + $0x34] sm:$0xf]
      %v257 = vld [vmem:[%s2 + $0x38] sm:$0xf]
      %v258 = vld [vmem:[%s2 + $0x3c] sm:$0xf]
      %v275 = vunpack.c.l.b16 %v227
      %v276 = vunpack.c.l.b16 %v228
      %v277 = vunpack.c.l.b16 %v229
      %v278 = vunpack.c.l.b16 %v230
      %v279 = vunpack.c.l.b16 %v231
      %v280 = vunpack.c.l.b16 %v232
      %v281 = vunpack.c.l.b16 %v233
      %v282 = vunpack.c.l.b16 %v234
      %v283 = vunpack.c.l.b16 %v235
      %v284 = vunpack.c.l.b16 %v236
      %v285 = vunpack.c.l.b16 %v237
      %v286 = vunpack.c.l.b16 %v238
      %v287 = vunpack.c.l.b16 %v239
      %v288 = vunpack.c.l.b16 %v240
      %v289 = vunpack.c.l.b16 %v241
      %v290 = vunpack.c.l.b16 %v242
      %v291 = vpack.c.b16 %v276, %v275
      %v292 = vpack.c.b16 %v278, %v277
      %v293 = vpack.c.b16 %v280, %v279
      %v294 = vpack.c.b16 %v282, %v281
      %v295 = vpack.c.b16 %v284, %v283
      %v296 = vpack.c.b16 %v286, %v285
      %v297 = vpack.c.b16 %v288, %v287
      %v298 = vpack.c.b16 %v290, %v289
      %v323 = vunpack.c.l.b16 %v243
      %v324 = vunpack.c.l.b16 %v244
      %v325 = vunpack.c.l.b16 %v245
      %v326 = vunpack.c.l.b16 %v246
      %v327 = vunpack.c.l.b16 %v247
      %v328 = vunpack.c.l.b16 %v248
      %v329 = vunpack.c.l.b16 %v249
      %v330 = vunpack.c.l.b16 %v250
      %v331 = vunpack.c.l.b16 %v251
      %v332 = vunpack.c.l.b16 %v252
      %v333 = vunpack.c.l.b16 %v253
      %v334 = vunpack.c.l.b16 %v254
      %v335 = vunpack.c.l.b16 %v255
      %v336 = vunpack.c.l.b16 %v256
      %v337 = vunpack.c.l.b16 %v257
      %v338 = vunpack.c.l.b16 %v258
      %v339 = vpack.c.b16 %v324, %v323
      %v340 = vpack.c.b16 %v326, %v325
      %v341 = vpack.c.b16 %v328, %v327
      %v342 = vpack.c.b16 %v330, %v329
      %v343 = vpack.c.b16 %v332, %v331
      %v344 = vpack.c.b16 %v334, %v333
      %v345 = vpack.c.b16 %v336, %v335
      %v346 = vpack.c.b16 %v338, %v337
      %355 = vmatpush.bf16.msra.mxu0 %v346
      %356 = vmatpush.bf16.msra.mxu0 %v345
      %357 = vmatpush.bf16.msra.mxu0 %v344
      %358 = vmatpush.bf16.msra.mxu0 %v343
      %359 = vmatpush.bf16.msra.mxu0 %v342
      %360 = vmatpush.bf16.msra.mxu0 %v341
      %361 = vmatpush.bf16.msra.mxu0 %v340
      %362 = vmatpush.bf16.msra.mxu0 %v339
      %363 = vmatmul.bf16.gmra.mxu0 %v291
      %v364 = vpop.f32.mrf.mxu0
      %v365 = vadd.f32 0.0, %v364
      %v366 = vpop.f32.mrf.mxu0
      %v367 = vadd.f32 0.0, %v366
      %368 = vmatmul.bf16.gmra.mxu0 %v292
      %v369 = vpop.f32.mrf.mxu0
      %v370 = vadd.f32 0.0, %v369
      %v371 = vpop.f32.mrf.mxu0
      %v372 = vadd.f32 0.0, %v371
      %373 = vmatmul.bf16.gmra.mxu0 %v293
      %v374 = vpop.f32.mrf.mxu0
      %v375 = vadd.f32 0.0, %v374
      %v376 = vpop.f32.mrf.mxu0
      %v377 = vadd.f32 0.0, %v376
      %378 = vmatmul.bf16.gmra.mxu0 %v294
      %v379 = vpop.f32.mrf.mxu0
      %v380 = vadd.f32 0.0, %v379
      %v381 = vpop.f32.mrf.mxu0
      %v382 = vadd.f32 0.0, %v381
      %383 = vmatmul.bf16.gmra.mxu0 %v295
      %v384 = vpop.f32.mrf.mxu0
      %v385 = vadd.f32 0.0, %v384
      %v386 = vpop.f32.mrf.mxu0
      %v387 = vadd.f32 0.0, %v386
      %388 = vmatmul.bf16.gmra.mxu0 %v296
      %v389 = vpop.f32.mrf.mxu0
      %v390 = vadd.f32 0.0, %v389
      %v391 = vpop.f32.mrf.mxu0
      %v392 = vadd.f32 0.0, %v391
      %393 = vmatmul.bf16.gmra.mxu0 %v297
      %v394 = vpop.f32.mrf.mxu0
      %v395 = vadd.f32 0.0, %v394
      %v396 = vpop.f32.mrf.mxu0
      %v397 = vadd.f32 0.0, %v396
      %398 = vmatmul.bf16.gmra.mxu0 %v298
      %v399 = vpop.f32.mrf.mxu0
      %v400 = vadd.f32 0.0, %v399
      %v401 = vpop.f32.mrf.mxu0
      %v402 = vadd.f32 0.0, %v401
      %403 = vdwg.mxu0
      %v404 = vld [vmem:[#allocation2] sm:$0xff]
      %v405 = vld [vmem:[#allocation2 + $0x8] sm:$0xff]
      %v406 = vld [vmem:[#allocation2 + $0x10] sm:$0xff]
      %v407 = vld [vmem:[#allocation2 + $0x18] sm:$0xff]
      %v408 = vld [vmem:[#allocation2 + $0x20] sm:$0xff]
      %v409 = vld [vmem:[#allocation2 + $0x28] sm:$0xff]
      %v410 = vld [vmem:[#allocation2 + $0x30] sm:$0xff]
      %v411 = vld [vmem:[#allocation2 + $0x38] sm:$0xff]
      %v412 = vld [vmem:[#allocation2 + $0x40] sm:$0xff]
      %v413 = vld [vmem:[#allocation2 + $0x48] sm:$0xff]
      %v414 = vld [vmem:[#allocation2 + $0x50] sm:$0xff]
      %v415 = vld [vmem:[#allocation2 + $0x58] sm:$0xff]
      %v416 = vld [vmem:[#allocation2 + $0x60] sm:$0xff]
      %v417 = vld [vmem:[#allocation2 + $0x68] sm:$0xff]
      %v418 = vld [vmem:[#allocation2 + $0x70] sm:$0xff]
      %v419 = vld [vmem:[#allocation2 + $0x78] sm:$0xff]
      %v420 = vld [vmem:[%s199] sm:$0xf]
      %v421 = vld [vmem:[%s199 + $0x4] sm:$0xf]
      %v422 = vld [vmem:[%s199 + $0x8] sm:$0xf]
      %v423 = vld [vmem:[%s199 + $0xc] sm:$0xf]
      %v424 = vld [vmem:[%s199 + $0x10] sm:$0xf]
      %v425 = vld [vmem:[%s199 + $0x14] sm:$0xf]
      %v426 = vld [vmem:[%s199 + $0x18] sm:$0xf]
      %v427 = vld [vmem:[%s199 + $0x1c] sm:$0xf]
      %v428 = vld [vmem:[%s199 + $0x20] sm:$0xf]
      %v429 = vld [vmem:[%s199 + $0x24] sm:$0xf]
      %v430 = vld [vmem:[%s199 + $0x28] sm:$0xf]
      %v431 = vld [vmem:[%s199 + $0x2c] sm:$0xf]
      %v432 = vld [vmem:[%s199 + $0x30] sm:$0xf]
      %v433 = vld [vmem:[%s199 + $0x34] sm:$0xf]
      %v434 = vld [vmem:[%s199 + $0x38] sm:$0xf]
      %v435 = vld [vmem:[%s199 + $0x3c] sm:$0xf]
      %v436 = vpack.c.bf16 %v367, %v365
      %v437 = vpack.c.bf16 %v372, %v370
      %v438 = vpack.c.bf16 %v377, %v375
      %v439 = vpack.c.bf16 %v382, %v380
      %v440 = vpack.c.bf16 %v387, %v385
      %v441 = vpack.c.bf16 %v392, %v390
      %v442 = vpack.c.bf16 %v397, %v395
      %v443 = vpack.c.bf16 %v402, %v400
      %v460 = vunpack.c.l.b16 %v420
      %v461 = vunpack.c.l.b16 %v421
      %v462 = vunpack.c.l.b16 %v422
      %v463 = vunpack.c.l.b16 %v423
      %v464 = vunpack.c.l.b16 %v424
      %v465 = vunpack.c.l.b16 %v425
      %v466 = vunpack.c.l.b16 %v426
      %v467 = vunpack.c.l.b16 %v427
      %v468 = vunpack.c.l.b16 %v428
      %v469 = vunpack.c.l.b16 %v429
      %v470 = vunpack.c.l.b16 %v430
      %v471 = vunpack.c.l.b16 %v431
      %v472 = vunpack.c.l.b16 %v432
      %v473 = vunpack.c.l.b16 %v433
      %v474 = vunpack.c.l.b16 %v434
      %v475 = vunpack.c.l.b16 %v435
      %v476 = vpack.c.b16 %v461, %v460
      %v477 = vpack.c.b16 %v463, %v462
      %v478 = vpack.c.b16 %v465, %v464
      %v479 = vpack.c.b16 %v467, %v466
      %v480 = vpack.c.b16 %v469, %v468
      %v481 = vpack.c.b16 %v471, %v470
      %v482 = vpack.c.b16 %v473, %v472
      %v483 = vpack.c.b16 %v475, %v474
      %492 = vxpose.xlu0.c.b16.start [1/8] %v476, 128
      %493 = vxpose.xlu0.c.b16.cont [2/8] %v477, 128
      %494 = vxpose.xlu0.c.b16.cont [3/8] %v478, 128
      %495 = vxpose.xlu0.c.b16.cont [4/8] %v479, 128
      %496 = vxpose.xlu0.c.b16.cont [5/8] %v480, 128
      %497 = vxpose.xlu0.c.b16.cont [6/8] %v481, 128
      %498 = vxpose.xlu0.c.b16.cont [7/8] %v482, 128
      %499 = vxpose.xlu0.c.b16.end [8/8] %v483, 128
      %v500 = vpop.trf.xlu0
      %v501 = vpop.trf.xlu0
      %v502 = vpop.trf.xlu0
      %v503 = vpop.trf.xlu0
      %v504 = vpop.trf.xlu0
      %v505 = vpop.trf.xlu0
      %v506 = vpop.trf.xlu0
      %v507 = vpop.trf.xlu0
      %508 = vmatpush.bf16.msra.mxu0 %v443
      %509 = vmatpush.bf16.msra.mxu0 %v442
      %510 = vmatpush.bf16.msra.mxu0 %v441
      %511 = vmatpush.bf16.msra.mxu0 %v440
      %512 = vmatpush.bf16.msra.mxu0 %v439
      %513 = vmatpush.bf16.msra.mxu0 %v438
      %514 = vmatpush.bf16.msra.mxu0 %v437
      %515 = vmatpush.bf16.msra.mxu0 %v436
      %516 = vmatmul.bf16.gmra.mxu0 %v500
      %v517 = vpop.f32.mrf.mxu0
      %v518 = vadd.f32 0.0, %v517
      %v519 = vpop.f32.mrf.mxu0
      %v520 = vadd.f32 0.0, %v519
      %521 = vmatmul.bf16.gmra.mxu0 %v501
      %v522 = vpop.f32.mrf.mxu0
      %v523 = vadd.f32 0.0, %v522
      %v524 = vpop.f32.mrf.mxu0
      %v525 = vadd.f32 0.0, %v524
      %526 = vmatmul.bf16.gmra.mxu0 %v502
      %v527 = vpop.f32.mrf.mxu0
      %v528 = vadd.f32 0.0, %v527
      %v529 = vpop.f32.mrf.mxu0
      %v530 = vadd.f32 0.0, %v529
      %531 = vmatmul.bf16.gmra.mxu0 %v503
      %v532 = vpop.f32.mrf.mxu0
      %v533 = vadd.f32 0.0, %v532
      %v534 = vpop.f32.mrf.mxu0
      %v535 = vadd.f32 0.0, %v534
      %536 = vmatmul.bf16.gmra.mxu0 %v504
      %v537 = vpop.f32.mrf.mxu0
      %v538 = vadd.f32 0.0, %v537
      %v539 = vpop.f32.mrf.mxu0
      %v540 = vadd.f32 0.0, %v539
      %541 = vmatmul.bf16.gmra.mxu0 %v505
      %v542 = vpop.f32.mrf.mxu0
      %v543 = vadd.f32 0.0, %v542
      %v544 = vpop.f32.mrf.mxu0
      %v545 = vadd.f32 0.0, %v544
      %546 = vmatmul.bf16.gmra.mxu0 %v506
      %v547 = vpop.f32.mrf.mxu0
      %v548 = vadd.f32 0.0, %v547
      %v549 = vpop.f32.mrf.mxu0
      %v550 = vadd.f32 0.0, %v549
      %551 = vmatmul.bf16.gmra.mxu0 %v507
      %v552 = vpop.f32.mrf.mxu0
      %v553 = vadd.f32 0.0, %v552
      %v554 = vpop.f32.mrf.mxu0
      %v555 = vadd.f32 0.0, %v554
      %556 = vdwg.mxu0
      %v557 = vadd.f32 %v404, %v518
      %v558 = vadd.f32 %v405, %v520
      %v559 = vadd.f32 %v406, %v523
      %v560 = vadd.f32 %v407, %v525
      %v561 = vadd.f32 %v408, %v528
      %v562 = vadd.f32 %v409, %v530
      %v563 = vadd.f32 %v410, %v533
      %v564 = vadd.f32 %v411, %v535
      %v565 = vadd.f32 %v412, %v538
      %v566 = vadd.f32 %v413, %v540
      %v567 = vadd.f32 %v414, %v543
      %v568 = vadd.f32 %v415, %v545
      %v569 = vadd.f32 %v416, %v548
      %v570 = vadd.f32 %v417, %v550
      %v571 = vadd.f32 %v418, %v553
      %v572 = vadd.f32 %v419, %v555
      %573 = vst [vmem:[#allocation2] sm:$0xff] %v557
      %574 = vst [vmem:[#allocation2 + $0x8] sm:$0xff] %v558
      %575 = vst [vmem:[#allocation2 + $0x10] sm:$0xff] %v559
      %576 = vst [vmem:[#allocation2 + $0x18] sm:$0xff] %v560
      %577 = vst [vmem:[#allocation2 + $0x20] sm:$0xff] %v561
      %578 = vst [vmem:[#allocation2 + $0x28] sm:$0xff] %v562
      %579 = vst [vmem:[#allocation2 + $0x30] sm:$0xff] %v563
      %580 = vst [vmem:[#allocation2 + $0x38] sm:$0xff] %v564
      %581 = vst [vmem:[#allocation2 + $0x40] sm:$0xff] %v565
      %582 = vst [vmem:[#allocation2 + $0x48] sm:$0xff] %v566
      %583 = vst [vmem:[#allocation2 + $0x50] sm:$0xff] %v567
      %584 = vst [vmem:[#allocation2 + $0x58] sm:$0xff] %v568
      %585 = vst [vmem:[#allocation2 + $0x60] sm:$0xff] %v569
      %586 = vst [vmem:[#allocation2 + $0x68] sm:$0xff] %v570
      %587 = vst [vmem:[#allocation2 + $0x70] sm:$0xff] %v571
      %588 = vst [vmem:[#allocation2 + $0x78] sm:$0xff] %v572
      %p589 = scmp.eq.s32.totalorder %s15, 1
      // Predicated region
      $region41: #{hypergraph_forward.3} parent=35 // pred_check
        %p590 = pneg %p589
      $region42: #{hypergraph_forward.3} parent=35 // pred_check_branch
        %592 = sbr.rel (%p590) target = $region44
      $region43: #{hypergraph_forward.3} parent=35 // pred_region
        %v593 = vld [vmem:[#allocation2] sm:$0xff]
        %v594 = vld [vmem:[#allocation2 + $0x8] sm:$0xff]
        %v595 = vld [vmem:[#allocation2 + $0x10] sm:$0xff]
        %v596 = vld [vmem:[#allocation2 + $0x18] sm:$0xff]
        %v597 = vld [vmem:[#allocation2 + $0x20] sm:$0xff]
        %v598 = vld [vmem:[#allocation2 + $0x28] sm:$0xff]
        %v599 = vld [vmem:[#allocation2 + $0x30] sm:$0xff]
        %v600 = vld [vmem:[#allocation2 + $0x38] sm:$0xff]
        %v601 = vld [vmem:[#allocation2 + $0x40] sm:$0xff]
        %v602 = vld [vmem:[#allocation2 + $0x48] sm:$0xff]
        %v603 = vld [vmem:[#allocation2 + $0x50] sm:$0xff]
        %v604 = vld [vmem:[#allocation2 + $0x58] sm:$0xff]
        %v605 = vld [vmem:[#allocation2 + $0x60] sm:$0xff]
        %v606 = vld [vmem:[#allocation2 + $0x68] sm:$0xff]
        %v607 = vld [vmem:[#allocation2 + $0x70] sm:$0xff]
        %v608 = vld [vmem:[#allocation2 + $0x78] sm:$0xff]
        %v609 = vld [vmem:[%s3] sm:$0xff]
        %v610 = vld [vmem:[%s3 + $0x8] sm:$0xff]
        %v611 = vld [vmem:[%s3 + $0x10] sm:$0xff]
        %v612 = vld [vmem:[%s3 + $0x18] sm:$0xff]
        %v613 = vld [vmem:[%s3 + $0x20] sm:$0xff]
        %v614 = vld [vmem:[%s3 + $0x28] sm:$0xff]
        %v615 = vld [vmem:[%s3 + $0x30] sm:$0xff]
        %v616 = vld [vmem:[%s3 + $0x38] sm:$0xff]
        %v617 = vld [vmem:[%s3 + $0x40] sm:$0xff]
        %v618 = vld [vmem:[%s3 + $0x48] sm:$0xff]
        %v619 = vld [vmem:[%s3 + $0x50] sm:$0xff]
        %v620 = vld [vmem:[%s3 + $0x58] sm:$0xff]
        %v621 = vld [vmem:[%s3 + $0x60] sm:$0xff]
        %v622 = vld [vmem:[%s3 + $0x68] sm:$0xff]
        %v623 = vld [vmem:[%s3 + $0x70] sm:$0xff]
        %v624 = vld [vmem:[%s3 + $0x78] sm:$0xff]
        %626 = vset.pattern.permute.xlu0 0
        %627 = vperm.xlu0 %626, %v609
        %v628 = vpop.permute.xlu0 %627
        %631 = vset.pattern.permute.xlu0 0
        %632 = vperm.xlu0 %631, %v610
        %v633 = vpop.permute.xlu0 %632
        %636 = vset.pattern.permute.xlu0 0
        %637 = vperm.xlu0 %636, %v611
        %v638 = vpop.permute.xlu0 %637
        %641 = vset.pattern.permute.xlu0 0
        %642 = vperm.xlu0 %641, %v612
        %v643 = vpop.permute.xlu0 %642
        %646 = vset.pattern.permute.xlu0 0
        %647 = vperm.xlu0 %646, %v613
        %v648 = vpop.permute.xlu0 %647
        %651 = vset.pattern.permute.xlu0 0
        %652 = vperm.xlu0 %651, %v614
        %v653 = vpop.permute.xlu0 %652
        %656 = vset.pattern.permute.xlu0 0
        %657 = vperm.xlu0 %656, %v615
        %v658 = vpop.permute.xlu0 %657
        %661 = vset.pattern.permute.xlu0 0
        %662 = vperm.xlu0 %661, %v616
        %v663 = vpop.permute.xlu0 %662
        %666 = vset.pattern.permute.xlu0 0
        %667 = vperm.xlu0 %666, %v617
        %v668 = vpop.permute.xlu0 %667
        %671 = vset.pattern.permute.xlu0 0
        %672 = vperm.xlu0 %671, %v618
        %v673 = vpop.permute.xlu0 %672
        %676 = vset.pattern.permute.xlu0 0
        %677 = vperm.xlu0 %676, %v619
        %v678 = vpop.permute.xlu0 %677
        %681 = vset.pattern.permute.xlu0 0
        %682 = vperm.xlu0 %681, %v620
        %v683 = vpop.permute.xlu0 %682
        %686 = vset.pattern.permute.xlu0 0
        %687 = vperm.xlu0 %686, %v621
        %v688 = vpop.permute.xlu0 %687
        %691 = vset.pattern.permute.xlu0 0
        %692 = vperm.xlu0 %691, %v622
        %v693 = vpop.permute.xlu0 %692
        %696 = vset.pattern.permute.xlu0 0
        %697 = vperm.xlu0 %696, %v623
        %v698 = vpop.permute.xlu0 %697
        %701 = vset.pattern.permute.xlu0 0
        %702 = vperm.xlu0 %701, %v624
        %v703 = vpop.permute.xlu0 %702
        %v705 = vmul.f32 %v593, %v628
        %v706 = vmul.f32 %v594, %v633
        %v707 = vmul.f32 %v595, %v638
        %v708 = vmul.f32 %v596, %v643
        %v709 = vmul.f32 %v597, %v648
        %v710 = vmul.f32 %v598, %v653
        %v711 = vmul.f32 %v599, %v658
        %v712 = vmul.f32 %v600, %v663
        %v713 = vmul.f32 %v601, %v668
        %v714 = vmul.f32 %v602, %v673
        %v715 = vmul.f32 %v603, %v678
        %v716 = vmul.f32 %v604, %v683
        %v717 = vmul.f32 %v605, %v688
        %v718 = vmul.f32 %v606, %v693
        %v719 = vmul.f32 %v607, %v698
        %v720 = vmul.f32 %v608, %v703
        %721 = vst [vmem:[%s4] sm:$0xff] %v705
        %722 = vst [vmem:[%s4 + $0x8] sm:$0xff] %v706
        %723 = vst [vmem:[%s4 + $0x10] sm:$0xff] %v707
        %724 = vst [vmem:[%s4 + $0x18] sm:$0xff] %v708
        %725 = vst [vmem:[%s4 + $0x20] sm:$0xff] %v709
        %726 = vst [vmem:[%s4 + $0x28] sm:$0xff] %v710
        %727 = vst [vmem:[%s4 + $0x30] sm:$0xff] %v711
        %728 = vst [vmem:[%s4 + $0x38] sm:$0xff] %v712
        %729 = vst [vmem:[%s4 + $0x40] sm:$0xff] %v713
        %730 = vst [vmem:[%s4 + $0x48] sm:$0xff] %v714
        %731 = vst [vmem:[%s4 + $0x50] sm:$0xff] %v715
        %732 = vst [vmem:[%s4 + $0x58] sm:$0xff] %v716
        %733 = vst [vmem:[%s4 + $0x60] sm:$0xff] %v717
        %734 = vst [vmem:[%s4 + $0x68] sm:$0xff] %v718
        %735 = vst [vmem:[%s4 + $0x70] sm:$0xff] %v719
        %736 = vst [vmem:[%s4 + $0x78] sm:$0xff] %v720
      $region44: #{hypergraph_forward.3} parent=35 // pred_fallthru
        _
      // Predicated region
      $region45: #{hypergraph_forward.3} parent=35 // pred_check
        %p737 = pneg %p122
      $region46: #{hypergraph_forward.3} parent=35 // pred_check_branch
        %739 = sbr.rel (%p737) target = $region48
      $region47: #{hypergraph_forward.3} parent=35 // pred_region
        _
      $region48: #{hypergraph_forward.3} parent=35 // pred_fallthru
        _
      // Predicated region
      $region49: #{hypergraph_forward.3} parent=35 // pred_check
        %p740 = pneg %p122
      $region50: #{hypergraph_forward.3} parent=35 // pred_check_branch
        %742 = sbr.rel (%p740) target = $region52
      $region51: #{hypergraph_forward.3} parent=35 // pred_region
        _
      $region52: #{hypergraph_forward.3} parent=35 // pred_fallthru
        _
    $region36: #{hypergraph_forward.3} parent=5 // pred_fallthru
      _
    %p743 = scmp.le.s32.totalorder 2, %s10
    // Predicated region
    $region53: #{hypergraph_forward.3} parent=5 // pred_check
      %p744 = pneg %p743
    $region54: #{hypergraph_forward.3} parent=5 // pred_check_branch
      %746 = sbr.rel (%p744) target = $region56
    $region55: #{hypergraph_forward.3} parent=5 // pred_region
      %s747 = ssub.s32 %s10, 2
    $region56: #{hypergraph_forward.3} parent=5 // pred_fallthru
      _
  $region6: #{hypergraph_forward.3} parent=0 // loop_footer
    %s14 = sadd.s32 1, %s10
  $region7: #{hypergraph_forward.3} parent=0 // loop_footer_branch
    %9 = sbr.rel target = $region3
  $region8: #{hypergraph_forward.3} parent=0 // loop_exit
    _

// kernel: hypergraph_forward.4
$region0: #{hypergraph_forward.4}
  #allocation0 [shape = 'u32[]', space=smem, size = 0x4, offset = 0x4, fixed_abs, tag = 'smem constant byte address 0x4 - core index']
  #allocation1 [shape = 'u32[72,128]{1,0:T(1,128)}', space=vmem, size = 0x9000, scoped, tag = 'internal scratch']
  #allocation2 [shape = 'f32[128,128]{1,0:T(8,128)}', space=vmem, size = 0x10000, scoped, tag = 'scratch operand']
  %s0 = inlined_call_operand.vmem [shape: bf16[256,128], index: 0, kind: input, shape index: {}]
  %s1 = inlined_call_operand.vmem [shape: f32[256,1], index: 1, kind: input, shape index: {}]
  %s2 = inlined_call_operand.vmem [shape: f32[128,128], index: 2, kind: input, shape index: {}]
  %s3 = inlined_call_operand.vmem [shape: f32[1,128], index: 3, kind: input, shape index: {}]
  %s4 = inlined_call_operand.vmem [shape: bf16[128,128], index: 4, kind: input, shape index: {}]
  %s5 = inlined_call_operand.vmem [shape: f32[128,1], index: 5, kind: input, shape index: {}]
  %s6 = inlined_call_operand.vmem [shape: f32[128,128], index: 6, kind: output, shape index: {}]
  %s7 = sld [smem:[#allocation0]]
  $region65: #{hypergraph_forward.4} parent=0
    _
  %s9 = ssub.s32 1, %s7
  %s10 = scalar_select 0, %s9, %s7
  loop: start=0, step=1, limit=4
  $region2: #{hypergraph_forward.4} parent=0 // loop_pre_header
    _
  $region3: #{hypergraph_forward.4} parent=0 // loop_header
    %s12 = sphi 0, %s16
    %p13 = scmp.ge.s32.totalorder %s12, 4
    %s22 = sphi 0, %s24
    %s25 = sphi 0, %s22
    %s26 = sphi 0, %s25
    %s42 = sphi 0, %s26
    %s48 = sphi 0, %s50
    %s51 = sphi 0, %s48
    %s52 = sphi 0, %s51
    %s68 = sphi 0, %s52
    %s72 = sphi 0, %s72
    %s74 = sphi 0, %s72
    %s75 = sphi 0, %s74
    %s89 = sphi 0, %s75
    %s93 = sphi 0, %s93
    %s95 = sphi 0, %s93
    %s96 = sphi 0, %s95
    %s110 = sphi 0, %s96
    %s114 = sphi 0, %s114
    %s116 = sphi 0, %s114
    %s117 = sphi 0, %s116
    %s131 = sphi 0, %s117
    %s135 = sphi 0, %s135
    %s137 = sphi 0, %s135
    %s138 = sphi 0, %s137
    %s152 = sphi 0, %s138
    %s156 = sphi 0, %s156
    %s158 = sphi 0, %s156
    %s159 = sphi 0, %s158
    %s173 = sphi 0, %s159
  $region4: #{hypergraph_forward.4} parent=0 // loop_header_branch
    %15 = sbr.rel (%p13) target = $region8
  $region5: #{hypergraph_forward.4} parent=0 // loop_body
    %s17 = ssub.s32 %s12, 1
    %s18 = ssub.s32 %s12, 2
    %s19 = sadd.s32 %s12, 1
    %s20 = ssub.s32 %s12, %s19
    %p21 = scmp.eq.s32.totalorder %s20, 0
    %s23 = sadd.s32 %s22, 1
    %s24 = scalar_select %p21, %s22, %s23
    %p27 = pneg %p21
    %p28 = scmp.eq.s32.totalorder %s12, 1
    %p29 = por %p27, %p28
    %p30 = scmp.ne.s32.totalorder %s22, %s25
    %p31 = scmp.eq.s32.totalorder %s12, 0
    %p32 = por %p30, %p31
    %p33 = scmp.ne.s32.totalorder %s22, %s25
    %p34 = scmp.eq.s32.totalorder %s17, 1
    %p35 = por %p33, %p34
    %p36 = scmp.ne.s32.totalorder %s25, %s26
    %p37 = scmp.eq.s32.totalorder %s17, 0
    %p38 = por %p36, %p37
    %p39 = scmp.ne.s32.totalorder %s25, %s26
    %p40 = scmp.eq.s32.totalorder %s18, 1
    %p41 = por %p39, %p40
    %p43 = scmp.ne.s32.totalorder %s26, %s42
    %p44 = scmp.eq.s32.totalorder %s18, 0
    %p45 = por %p43, %p44
    %s46 = ssub.s32 %s12, %s19
    %p47 = scmp.eq.s32.totalorder %s46, 0
    %s49 = sadd.s32 %s48, 1
    %s50 = scalar_select %p47, %s48, %s49
    %p53 = pneg %p47
    %p54 = scmp.eq.s32.totalorder %s12, 1
    %p55 = por %p53, %p54
    %p56 = scmp.ne.s32.totalorder %s48, %s51
    %p57 = scmp.eq.s32.totalorder %s12, 0
    %p58 = por %p56, %p57
    %p59 = scmp.ne.s32.totalorder %s48, %s51
    %p60 = scmp.eq.s32.totalorder %s17, 1
    %p61 = por %p59, %p60
    %p62 = scmp.ne.s32.totalorder %s51, %s52
    %p63 = scmp.eq.s32.totalorder %s17, 0
    %p64 = por %p62, %p63
    %p65 = scmp.ne.s32.totalorder %s51, %s52
    %p66 = scmp.eq.s32.totalorder %s18, 1
    %p67 = por %p65, %p66
    %p69 = scmp.ne.s32.totalorder %s52, %s68
    %p70 = scmp.eq.s32.totalorder %s18, 0
    %p71 = por %p69, %p70
    %s73 = sadd.s32 %s72, 1
    %p76 = scmp.eq.s32.totalorder %s12, 1
    %p77 = scmp.ne.s32.totalorder %s72, %s74
    %p78 = scmp.eq.s32.totalorder %s12, 0
    %p79 = por %p77, %p78
    %p80 = scmp.ne.s32.totalorder %s72, %s74
    %p81 = scmp.eq.s32.totalorder %s17, 1
    %p82 = por %p80, %p81
    %p83 = scmp.ne.s32.totalorder %s74, %s75
    %p84 = scmp.eq.s32.totalorder %s17, 0
    %p85 = por %p83, %p84
    %p86 = scmp.ne.s32.totalorder %s74, %s75
    %p87 = scmp.eq.s32.totalorder %s18, 1
    %p88 = por %p86, %p87
    %p90 = scmp.ne.s32.totalorder %s75, %s89
    %p91 = scmp.eq.s32.totalorder %s18, 0
    %p92 = por %p90, %p91
    %s94 = sadd.s32 %s93, 1
    %p97 = scmp.eq.s32.totalorder %s12, 1
    %p98 = scmp.ne.s32.totalorder %s93, %s95
    %p99 = scmp.eq.s32.totalorder %s12, 0
    %p100 = por %p98, %p99
    %p101 = scmp.ne.s32.totalorder %s93, %s95
    %p102 = scmp.eq.s32.totalorder %s17, 1
    %p103 = por %p101, %p102
    %p104 = scmp.ne.s32.totalorder %s95, %s96
    %p105 = scmp.eq.s32.totalorder %s17, 0
    %p106 = por %p104, %p105
    %p107 = scmp.ne.s32.totalorder %s95, %s96
    %p108 = scmp.eq.s32.totalorder %s18, 1
    %p109 = por %p107, %p108
    %p111 = scmp.ne.s32.totalorder %s96, %s110
    %p112 = scmp.eq.s32.totalorder %s18, 0
    %p113 = por %p111, %p112
    %s115 = sadd.s32 %s114, 1
    %p118 = scmp.eq.s32.totalorder %s12, 1
    %p119 = scmp.ne.s32.totalorder %s114, %s116
    %p120 = scmp.eq.s32.totalorder %s12, 0
    %p121 = por %p119, %p120
    %p122 = scmp.ne.s32.totalorder %s114, %s116
    %p123 = scmp.eq.s32.totalorder %s17, 1
    %p124 = por %p122, %p123
    %p125 = scmp.ne.s32.totalorder %s116, %s117
    %p126 = scmp.eq.s32.totalorder %s17, 0
    %p127 = por %p125, %p126
    %p128 = scmp.ne.s32.totalorder %s116, %s117
    %p129 = scmp.eq.s32.totalorder %s18, 1
    %p130 = por %p128, %p129
    %p132 = scmp.ne.s32.totalorder %s117, %s131
    %p133 = scmp.eq.s32.totalorder %s18, 0
    %p134 = por %p132, %p133
    %s136 = sadd.s32 %s135, 1
    %p139 = scmp.eq.s32.totalorder %s12, 1
    %p140 = scmp.ne.s32.totalorder %s135, %s137
    %p141 = scmp.eq.s32.totalorder %s12, 0
    %p142 = por %p140, %p141
    %p143 = scmp.ne.s32.totalorder %s135, %s137
    %p144 = scmp.eq.s32.totalorder %s17, 1
    %p145 = por %p143, %p144
    %p146 = scmp.ne.s32.totalorder %s137, %s138
    %p147 = scmp.eq.s32.totalorder %s17, 0
    %p148 = por %p146, %p147
    %p149 = scmp.ne.s32.totalorder %s137, %s138
    %p150 = scmp.eq.s32.totalorder %s18, 1
    %p151 = por %p149, %p150
    %p153 = scmp.ne.s32.totalorder %s138, %s152
    %p154 = scmp.eq.s32.totalorder %s18, 0
    %p155 = por %p153, %p154
    %s157 = sadd.s32 %s156, 1
    %p160 = scmp.eq.s32.totalorder %s12, 1
    %p161 = scmp.ne.s32.totalorder %s156, %s158
    %p162 = scmp.eq.s32.totalorder %s12, 0
    %p163 = por %p161, %p162
    %p164 = scmp.ne.s32.totalorder %s156, %s158
    %p165 = scmp.eq.s32.totalorder %s17, 1
    %p166 = por %p164, %p165
    %p167 = scmp.ne.s32.totalorder %s158, %s159
    %p168 = scmp.eq.s32.totalorder %s17, 0
    %p169 = por %p167, %p168
    %p170 = scmp.ne.s32.totalorder %s158, %s159
    %p171 = scmp.eq.s32.totalorder %s18, 1
    %p172 = por %p170, %p171
    %p174 = scmp.ne.s32.totalorder %s159, %s173
    %p175 = scmp.eq.s32.totalorder %s18, 0
    %p176 = por %p174, %p175
    %p177 = scmp.le.s32.totalorder 1, %s12
    %p178 = scmp.lt.s32.totalorder %s12, 3
    %p179 = pnand %p177, %p178
    %p180 = pneg %p179
    // Predicated region
    $region9: #{hypergraph_forward.4} parent=5 // pred_check
      _
    $region10: #{hypergraph_forward.4} parent=5 // pred_check_branch
      %182 = sbr.rel (%p179) target = $region12
    $region11: #{hypergraph_forward.4} parent=5 // pred_region
      %s183 = ssub.s32 %s12, 1
      // Predicated region
      $region13: #{hypergraph_forward.4} parent=11 // pred_check
        %p184 = pneg %p85
      $region14: #{hypergraph_forward.4} parent=11 // pred_check_branch
        %186 = sbr.rel (%p184) target = $region16
      $region15: #{hypergraph_forward.4} parent=11 // pred_region
        _
      $region16: #{hypergraph_forward.4} parent=11 // pred_fallthru
        _
      // Predicated region
      $region17: #{hypergraph_forward.4} parent=11 // pred_check
        %p187 = pneg %p106
      $region18: #{hypergraph_forward.4} parent=11 // pred_check_branch
        %189 = sbr.rel (%p187) target = $region20
      $region19: #{hypergraph_forward.4} parent=11 // pred_region
        _
      $region20: #{hypergraph_forward.4} parent=11 // pred_fallthru
        _
      // Predicated region
      $region21: #{hypergraph_forward.4} parent=11 // pred_check
        %p190 = pneg %p127
      $region22: #{hypergraph_forward.4} parent=11 // pred_check_branch
        %192 = sbr.rel (%p190) target = $region24
      $region23: #{hypergraph_forward.4} parent=11 // pred_region
        _
      $region24: #{hypergraph_forward.4} parent=11 // pred_fallthru
        _
      // Predicated region
      $region25: #{hypergraph_forward.4} parent=11 // pred_check
        %p193 = pneg %p148
      $region26: #{hypergraph_forward.4} parent=11 // pred_check_branch
        %195 = sbr.rel (%p193) target = $region28
      $region27: #{hypergraph_forward.4} parent=11 // pred_region
        _
      $region28: #{hypergraph_forward.4} parent=11 // pred_fallthru
        _
    $region12: #{hypergraph_forward.4} parent=5 // pred_fallthru
      _
    %p196 = scmp.lt.s32.totalorder %s12, 2
    // Predicated region
    $region29: #{hypergraph_forward.4} parent=5 // pred_check
      %p197 = pneg %p196
    $region30: #{hypergraph_forward.4} parent=5 // pred_check_branch
      %199 = sbr.rel (%p197) target = $region32
    $region31: #{hypergraph_forward.4} parent=5 // pred_region
      // Predicated region
      $region33: #{hypergraph_forward.4} parent=31 // pred_check
        %p200 = pneg %p32
      $region34: #{hypergraph_forward.4} parent=31 // pred_check_branch
        %202 = sbr.rel (%p200) target = $region36
      $region35: #{hypergraph_forward.4} parent=31 // pred_region
        %s203 = smul.u32 16, %s12
        %p204 = scmp.lt.s32.totalorder %s203, 31
        %s205 = scalar_select %p204, %s203, 31
        %s206 = smul.addr %s205, 4
        %s207 = scalar_lea.vmem %s0, %s206
        %s208 = smul.u32 16, %s12
      $region36: #{hypergraph_forward.4} parent=31 // pred_fallthru
        _
      // Predicated region
      $region37: #{hypergraph_forward.4} parent=31 // pred_check
        %p209 = pneg %p58
      $region38: #{hypergraph_forward.4} parent=31 // pred_check_branch
        %211 = sbr.rel (%p209) target = $region40
      $region39: #{hypergraph_forward.4} parent=31 // pred_region
        %s212 = smul.u32 16, %s12
        %p213 = scmp.lt.s32.totalorder %s212, 31
        %s214 = scalar_select %p213, %s212, 31
        %s215 = smul.addr %s214, 8
        %s216 = scalar_lea.vmem %s1, %s215
        %s217 = smul.u32 16, %s12
      $region40: #{hypergraph_forward.4} parent=31 // pred_fallthru
        _
    $region32: #{hypergraph_forward.4} parent=5 // pred_fallthru
      _
    %p218 = scmp.le.s32.totalorder 1, %s12
    %p219 = scmp.lt.s32.totalorder %s12, 3
    %p220 = pnand %p218, %p219
    %p221 = pneg %p220
    // Predicated region
    $region41: #{hypergraph_forward.4} parent=5 // pred_check
      _
    $region42: #{hypergraph_forward.4} parent=5 // pred_check_branch
      %223 = sbr.rel (%p220) target = $region44
    $region43: #{hypergraph_forward.4} parent=5 // pred_region
      %s224 = ssub.s32 %s12, 1
      %s225 = smul.u32 16, %s17
      %p226 = scmp.lt.s32.totalorder %s225, 31
      %s227 = scalar_select %p226, %s225, 31
      %s228 = smul.addr %s227, 4
      %s229 = scalar_lea.vmem %s0, %s228
      %p230 = pneg %p38
      %p231 = pneg %p35
      %s232 = smul.u32 16, %s17
      %p233 = scmp.lt.s32.totalorder %s232, 31
      %s234 = scalar_select %p233, %s232, 31
      %s235 = smul.addr %s234, 8
      %s236 = scalar_lea.vmem %s1, %s235
      %p237 = pneg %p64
      %p238 = pneg %p61
      %p239 = pneg %p85
      %p240 = pneg %p82
      %p241 = pneg %p106
      %p242 = pneg %p103
      %p243 = pneg %p127
      %p244 = pneg %p124
      %p245 = pneg %p148
      %p246 = pneg %p145
      %p247 = pneg %p169
      %p248 = pneg %p166
      %s249 = smul.u32 16, %s17
      %p250 = scmp.lt.s32.totalorder %s249, 31
      %s251 = scalar_select %p250, %s249, 31
      %s252 = smul.addr %s251, 4
      %s253 = scalar_lea.vmem %s0, %s252
      %s254 = smul.u32 16, %s17
      %s255 = smul.u32 16, %s17
      %p256 = scmp.lt.s32.totalorder %s255, 31
      %s257 = scalar_select %p256, %s255, 31
      %s258 = smul.addr %s257, 8
      %s259 = scalar_lea.vmem %s1, %s258
      %s260 = smul.u32 16, %s17
      %p261 = scmp.eq.s32.totalorder %s17, 0
      // Predicated region
      $region45: #{hypergraph_forward.4} parent=43 // pred_check
        %p262 = pneg %p261
      $region46: #{hypergraph_forward.4} parent=43 // pred_check_branch
        %264 = sbr.rel (%p262) target = $region48
      $region47: #{hypergraph_forward.4} parent=43 // pred_region
        %265 = vst [vmem:[#allocation2] sm:$0xff] 0.0
        %266 = vst [vmem:[#allocation2 + $0x8] sm:$0xff] 0.0
        %267 = vst [vmem:[#allocation2 + $0x10] sm:$0xff] 0.0
        %268 = vst [vmem:[#allocation2 + $0x18] sm:$0xff] 0.0
        %269 = vst [vmem:[#allocation2 + $0x20] sm:$0xff] 0.0
        %270 = vst [vmem:[#allocation2 + $0x28] sm:$0xff] 0.0
        %271 = vst [vmem:[#allocation2 + $0x30] sm:$0xff] 0.0
        %272 = vst [vmem:[#allocation2 + $0x38] sm:$0xff] 0.0
        %273 = vst [vmem:[#allocation2 + $0x40] sm:$0xff] 0.0
        %274 = vst [vmem:[#allocation2 + $0x48] sm:$0xff] 0.0
        %275 = vst [vmem:[#allocation2 + $0x50] sm:$0xff] 0.0
        %276 = vst [vmem:[#allocation2 + $0x58] sm:$0xff] 0.0
        %277 = vst [vmem:[#allocation2 + $0x60] sm:$0xff] 0.0
        %278 = vst [vmem:[#allocation2 + $0x68] sm:$0xff] 0.0
        %279 = vst [vmem:[#allocation2 + $0x70] sm:$0xff] 0.0
        %280 = vst [vmem:[#allocation2 + $0x78] sm:$0xff] 0.0
      $region48: #{hypergraph_forward.4} parent=43 // pred_fallthru
        _
      %v281 = vld [vmem:[%s253] sm:$0xf]
      %v282 = vld [vmem:[%s253 + $0x4] sm:$0xf]
      %v283 = vld [vmem:[%s253 + $0x8] sm:$0xf]
      %v284 = vld [vmem:[%s253 + $0xc] sm:$0xf]
      %v285 = vld [vmem:[%s253 + $0x10] sm:$0xf]
      %v286 = vld [vmem:[%s253 + $0x14] sm:$0xf]
      %v287 = vld [vmem:[%s253 + $0x18] sm:$0xf]
      %v288 = vld [vmem:[%s253 + $0x1c] sm:$0xf]
      %v289 = vld [vmem:[%s253 + $0x20] sm:$0xf]
      %v290 = vld [vmem:[%s253 + $0x24] sm:$0xf]
      %v291 = vld [vmem:[%s253 + $0x28] sm:$0xf]
      %v292 = vld [vmem:[%s253 + $0x2c] sm:$0xf]
      %v293 = vld [vmem:[%s253 + $0x30] sm:$0xf]
      %v294 = vld [vmem:[%s253 + $0x34] sm:$0xf]
      %v295 = vld [vmem:[%s253 + $0x38] sm:$0xf]
      %v296 = vld [vmem:[%s253 + $0x3c] sm:$0xf]
      %v297 = vld [vmem:[%s2] sm:$0xff]
      %v298 = vld [vmem:[%s2 + $0x8] sm:$0xff]
      %v299 = vld [vmem:[%s2 + $0x10] sm:$0xff]
      %v300 = vld [vmem:[%s2 + $0x18] sm:$0xff]
      %v301 = vld [vmem:[%s2 + $0x20] sm:$0xff]
      %v302 = vld [vmem:[%s2 + $0x28] sm:$0xff]
      %v303 = vld [vmem:[%s2 + $0x30] sm:$0xff]
      %v304 = vld [vmem:[%s2 + $0x38] sm:$0xff]
      %v305 = vld [vmem:[%s2 + $0x40] sm:$0xff]
      %v306 = vld [vmem:[%s2 + $0x48] sm:$0xff]
      %v307 = vld [vmem:[%s2 + $0x50] sm:$0xff]
      %v308 = vld [vmem:[%s2 + $0x58] sm:$0xff]
      %v309 = vld [vmem:[%s2 + $0x60] sm:$0xff]
      %v310 = vld [vmem:[%s2 + $0x68] sm:$0xff]
      %v311 = vld [vmem:[%s2 + $0x70] sm:$0xff]
      %v312 = vld [vmem:[%s2 + $0x78] sm:$0xff]
      %v313 = vpack.c.bf16 %v298, %v297
      %v314 = vpack.c.bf16 %v300, %v299
      %v315 = vpack.c.bf16 %v302, %v301
      %v316 = vpack.c.bf16 %v304, %v303
      %v317 = vpack.c.bf16 %v306, %v305
      %v318 = vpack.c.bf16 %v308, %v307
      %v319 = vpack.c.bf16 %v310, %v309
      %v320 = vpack.c.bf16 %v312, %v311
      %v337 = vunpack.c.l.b16 %v281
      %v338 = vunpack.c.l.b16 %v282
      %v339 = vunpack.c.l.b16 %v283
      %v340 = vunpack.c.l.b16 %v284
      %v341 = vunpack.c.l.b16 %v285
      %v342 = vunpack.c.l.b16 %v286
      %v343 = vunpack.c.l.b16 %v287
      %v344 = vunpack.c.l.b16 %v288
      %v345 = vunpack.c.l.b16 %v289
      %v346 = vunpack.c.l.b16 %v290
      %v347 = vunpack.c.l.b16 %v291
      %v348 = vunpack.c.l.b16 %v292
      %v349 = vunpack.c.l.b16 %v293
      %v350 = vunpack.c.l.b16 %v294
      %v351 = vunpack.c.l.b16 %v295
      %v352 = vunpack.c.l.b16 %v296
      %v353 = vpack.c.b16 %v338, %v337
      %v354 = vpack.c.b16 %v340, %v339
      %v355 = vpack.c.b16 %v342, %v341
      %v356 = vpack.c.b16 %v344, %v343
      %v357 = vpack.c.b16 %v346, %v345
      %v358 = vpack.c.b16 %v348, %v347
      %v359 = vpack.c.b16 %v350, %v349
      %v360 = vpack.c.b16 %v352, %v351
      %369 = vmatpush.bf16.msra.mxu0 %v320
      %370 = vmatpush.bf16.msra.mxu0 %v319
      %371 = vmatpush.bf16.msra.mxu0 %v318
      %372 = vmatpush.bf16.msra.mxu0 %v317
      %373 = vmatpush.bf16.msra.mxu0 %v316
      %374 = vmatpush.bf16.msra.mxu0 %v315
      %375 = vmatpush.bf16.msra.mxu0 %v314
      %376 = vmatpush.bf16.msra.mxu0 %v313
      %377 = vmatmul.bf16.gmra.mxu0 %v353
      %v378 = vpop.f32.mrf.mxu0
      %v379 = vadd.f32 0.0, %v378
      %v380 = vpop.f32.mrf.mxu0
      %v381 = vadd.f32 0.0, %v380
      %382 = vmatmul.bf16.gmra.mxu0 %v354
      %v383 = vpop.f32.mrf.mxu0
      %v384 = vadd.f32 0.0, %v383
      %v385 = vpop.f32.mrf.mxu0
      %v386 = vadd.f32 0.0, %v385
      %387 = vmatmul.bf16.gmra.mxu0 %v355
      %v388 = vpop.f32.mrf.mxu0
      %v389 = vadd.f32 0.0, %v388
      %v390 = vpop.f32.mrf.mxu0
      %v391 = vadd.f32 0.0, %v390
      %392 = vmatmul.bf16.gmra.mxu0 %v356
      %v393 = vpop.f32.mrf.mxu0
      %v394 = vadd.f32 0.0, %v393
      %v395 = vpop.f32.mrf.mxu0
      %v396 = vadd.f32 0.0, %v395
      %397 = vmatmul.bf16.gmra.mxu0 %v357
      %v398 = vpop.f32.mrf.mxu0
      %v399 = vadd.f32 0.0, %v398
      %v400 = vpop.f32.mrf.mxu0
      %v401 = vadd.f32 0.0, %v400
      %402 = vmatmul.bf16.gmra.mxu0 %v358
      %v403 = vpop.f32.mrf.mxu0
      %v404 = vadd.f32 0.0, %v403
      %v405 = vpop.f32.mrf.mxu0
      %v406 = vadd.f32 0.0, %v405
      %407 = vmatmul.bf16.gmra.mxu0 %v359
      %v408 = vpop.f32.mrf.mxu0
      %v409 = vadd.f32 0.0, %v408
      %v410 = vpop.f32.mrf.mxu0
      %v411 = vadd.f32 0.0, %v410
      %412 = vmatmul.bf16.gmra.mxu0 %v360
      %v413 = vpop.f32.mrf.mxu0
      %v414 = vadd.f32 0.0, %v413
      %v415 = vpop.f32.mrf.mxu0
      %v416 = vadd.f32 0.0, %v415
      %417 = vdwg.mxu0
      %v418 = vld [vmem:[%s259] sm:$0xff]
      %v419 = vld [vmem:[%s259 + $0x8] sm:$0xff]
      %v420 = vld [vmem:[%s259 + $0x10] sm:$0xff]
      %v421 = vld [vmem:[%s259 + $0x18] sm:$0xff]
      %v422 = vld [vmem:[%s259 + $0x20] sm:$0xff]
      %v423 = vld [vmem:[%s259 + $0x28] sm:$0xff]
      %v424 = vld [vmem:[%s259 + $0x30] sm:$0xff]
      %v425 = vld [vmem:[%s259 + $0x38] sm:$0xff]
      %v426 = vld [vmem:[%s259 + $0x40] sm:$0xff]
      %v427 = vld [vmem:[%s259 + $0x48] sm:$0xff]
      %v428 = vld [vmem:[%s259 + $0x50] sm:$0xff]
      %v429 = vld [vmem:[%s259 + $0x58] sm:$0xff]
      %v430 = vld [vmem:[%s259 + $0x60] sm:$0xff]
      %v431 = vld [vmem:[%s259 + $0x68] sm:$0xff]
      %v432 = vld [vmem:[%s259 + $0x70] sm:$0xff]
      %v433 = vld [vmem:[%s259 + $0x78] sm:$0xff]
      %435 = vset.pattern.permute.xlu0 0
      %436 = vperm.xlu0 %435, %v418
      %v437 = vpop.permute.xlu0 %436
      %440 = vset.pattern.permute.xlu0 0
      %441 = vperm.xlu0 %440, %v419
      %v442 = vpop.permute.xlu0 %441
      %445 = vset.pattern.permute.xlu0 0
      %446 = vperm.xlu0 %445, %v420
      %v447 = vpop.permute.xlu0 %446
      %450 = vset.pattern.permute.xlu0 0
      %451 = vperm.xlu0 %450, %v421
      %v452 = vpop.permute.xlu0 %451
      %455 = vset.pattern.permute.xlu0 0
      %456 = vperm.xlu0 %455, %v422
      %v457 = vpop.permute.xlu0 %456
      %460 = vset.pattern.permute.xlu0 0
      %461 = vperm.xlu0 %460, %v423
      %v462 = vpop.permute.xlu0 %461
      %465 = vset.pattern.permute.xlu0 0
      %466 = vperm.xlu0 %465, %v424
      %v467 = vpop.permute.xlu0 %466
      %470 = vset.pattern.permute.xlu0 0
      %471 = vperm.xlu0 %470, %v425
      %v472 = vpop.permute.xlu0 %471
      %475 = vset.pattern.permute.xlu0 0
      %476 = vperm.xlu0 %475, %v426
      %v477 = vpop.permute.xlu0 %476
      %480 = vset.pattern.permute.xlu0 0
      %481 = vperm.xlu0 %480, %v427
      %v482 = vpop.permute.xlu0 %481
      %485 = vset.pattern.permute.xlu0 0
      %486 = vperm.xlu0 %485, %v428
      %v487 = vpop.permute.xlu0 %486
      %490 = vset.pattern.permute.xlu0 0
      %491 = vperm.xlu0 %490, %v429
      %v492 = vpop.permute.xlu0 %491
      %495 = vset.pattern.permute.xlu0 0
      %496 = vperm.xlu0 %495, %v430
      %v497 = vpop.permute.xlu0 %496
      %500 = vset.pattern.permute.xlu0 0
      %501 = vperm.xlu0 %500, %v431
      %v502 = vpop.permute.xlu0 %501
      %505 = vset.pattern.permute.xlu0 0
      %506 = vperm.xlu0 %505, %v432
      %v507 = vpop.permute.xlu0 %506
      %510 = vset.pattern.permute.xlu0 0
      %511 = vperm.xlu0 %510, %v433
      %v512 = vpop.permute.xlu0 %511
      %v514 = vmul.f32 %v379, %v437
      %v515 = vmul.f32 %v381, %v442
      %v516 = vmul.f32 %v384, %v447
      %v517 = vmul.f32 %v386, %v452
      %v518 = vmul.f32 %v389, %v457
      %v519 = vmul.f32 %v391, %v462
      %v520 = vmul.f32 %v394, %v467
      %v521 = vmul.f32 %v396, %v472
      %v522 = vmul.f32 %v399, %v477
      %v523 = vmul.f32 %v401, %v482
      %v524 = vmul.f32 %v404, %v487
      %v525 = vmul.f32 %v406, %v492
      %v526 = vmul.f32 %v409, %v497
      %v527 = vmul.f32 %v411, %v502
      %v528 = vmul.f32 %v414, %v507
      %v529 = vmul.f32 %v416, %v512
      %v530 = vld [vmem:[%s3] sm:$0x1]
      %v532 = vperm.slane %v530, 0
      %v534 = vadd.f32 %v514, %v532
      %v535 = vadd.f32 %v515, %v532
      %v536 = vadd.f32 %v516, %v532
      %v537 = vadd.f32 %v517, %v532
      %v538 = vadd.f32 %v518, %v532
      %v539 = vadd.f32 %v519, %v532
      %v540 = vadd.f32 %v520, %v532
      %v541 = vadd.f32 %v521, %v532
      %v542 = vadd.f32 %v522, %v532
      %v543 = vadd.f32 %v523, %v532
      %v544 = vadd.f32 %v524, %v532
      %v545 = vadd.f32 %v525, %v532
      %v546 = vadd.f32 %v526, %v532
      %v547 = vadd.f32 %v527, %v532
      %v548 = vadd.f32 %v528, %v532
      %v549 = vadd.f32 %v529, %v532
      %v550 = vmax.f32 %v534, 0.0
      %v551 = vmax.f32 %v535, 0.0
      %v552 = vmax.f32 %v536, 0.0
      %v553 = vmax.f32 %v537, 0.0
      %v554 = vmax.f32 %v538, 0.0
      %v555 = vmax.f32 %v539, 0.0
      %v556 = vmax.f32 %v540, 0.0
      %v557 = vmax.f32 %v541, 0.0
      %v558 = vmax.f32 %v542, 0.0
      %v559 = vmax.f32 %v543, 0.0
      %v560 = vmax.f32 %v544, 0.0
      %v561 = vmax.f32 %v545, 0.0
      %v562 = vmax.f32 %v546, 0.0
      %v563 = vmax.f32 %v547, 0.0
      %v564 = vmax.f32 %v548, 0.0
      %v565 = vmax.f32 %v549, 0.0
      %v566 = vpack.c.bf16 %v551, %v550
      %v567 = vpack.c.bf16 %v553, %v552
      %v568 = vpack.c.bf16 %v555, %v554
      %v569 = vpack.c.bf16 %v557, %v556
      %v570 = vpack.c.bf16 %v559, %v558
      %v571 = vpack.c.bf16 %v561, %v560
      %v572 = vpack.c.bf16 %v563, %v562
      %v573 = vpack.c.bf16 %v565, %v564
      %v574 = vld [vmem:[%s4] sm:$0xf]
      %v575 = vld [vmem:[%s4 + $0x4] sm:$0xf]
      %v576 = vld [vmem:[%s4 + $0x8] sm:$0xf]
      %v577 = vld [vmem:[%s4 + $0xc] sm:$0xf]
      %v578 = vld [vmem:[%s4 + $0x10] sm:$0xf]
      %v579 = vld [vmem:[%s4 + $0x14] sm:$0xf]
      %v580 = vld [vmem:[%s4 + $0x18] sm:$0xf]
      %v581 = vld [vmem:[%s4 + $0x1c] sm:$0xf]
      %v582 = vld [vmem:[%s4 + $0x20] sm:$0xf]
      %v583 = vld [vmem:[%s4 + $0x24] sm:$0xf]
      %v584 = vld [vmem:[%s4 + $0x28] sm:$0xf]
      %v585 = vld [vmem:[%s4 + $0x2c] sm:$0xf]
      %v586 = vld [vmem:[%s4 + $0x30] sm:$0xf]
      %v587 = vld [vmem:[%s4 + $0x34] sm:$0xf]
      %v588 = vld [vmem:[%s4 + $0x38] sm:$0xf]
      %v589 = vld [vmem:[%s4 + $0x3c] sm:$0xf]
      %v606 = vunpack.c.l.b16 %v574
      %v607 = vunpack.c.l.b16 %v575
      %v608 = vunpack.c.l.b16 %v576
      %v609 = vunpack.c.l.b16 %v577
      %v610 = vunpack.c.l.b16 %v578
      %v611 = vunpack.c.l.b16 %v579
      %v612 = vunpack.c.l.b16 %v580
      %v613 = vunpack.c.l.b16 %v581
      %v614 = vunpack.c.l.b16 %v582
      %v615 = vunpack.c.l.b16 %v583
      %v616 = vunpack.c.l.b16 %v584
      %v617 = vunpack.c.l.b16 %v585
      %v618 = vunpack.c.l.b16 %v586
      %v619 = vunpack.c.l.b16 %v587
      %v620 = vunpack.c.l.b16 %v588
      %v621 = vunpack.c.l.b16 %v589
      %v622 = vpack.c.b16 %v607, %v606
      %v623 = vpack.c.b16 %v609, %v608
      %v624 = vpack.c.b16 %v611, %v610
      %v625 = vpack.c.b16 %v613, %v612
      %v626 = vpack.c.b16 %v615, %v614
      %v627 = vpack.c.b16 %v617, %v616
      %v628 = vpack.c.b16 %v619, %v618
      %v629 = vpack.c.b16 %v621, %v620
      %638 = vmatpush.bf16.msra.mxu0 %v629
      %639 = vmatpush.bf16.msra.mxu0 %v628
      %640 = vmatpush.bf16.msra.mxu0 %v627
      %641 = vmatpush.bf16.msra.mxu0 %v626
      %642 = vmatpush.bf16.msra.mxu0 %v625
      %643 = vmatpush.bf16.msra.mxu0 %v624
      %644 = vmatpush.bf16.msra.mxu0 %v623
      %645 = vmatpush.bf16.msra.mxu0 %v622
      %646 = vmatmul.bf16.gmra.mxu0 %v566
      %v647 = vpop.f32.mrf.mxu0
      %v648 = vadd.f32 0.0, %v647
      %v649 = vpop.f32.mrf.mxu0
      %v650 = vadd.f32 0.0, %v649
      %651 = vmatmul.bf16.gmra.mxu0 %v567
      %v652 = vpop.f32.mrf.mxu0
      %v653 = vadd.f32 0.0, %v652
      %v654 = vpop.f32.mrf.mxu0
      %v655 = vadd.f32 0.0, %v654
      %656 = vmatmul.bf16.gmra.mxu0 %v568
      %v657 = vpop.f32.mrf.mxu0
      %v658 = vadd.f32 0.0, %v657
      %v659 = vpop.f32.mrf.mxu0
      %v660 = vadd.f32 0.0, %v659
      %661 = vmatmul.bf16.gmra.mxu0 %v569
      %v662 = vpop.f32.mrf.mxu0
      %v663 = vadd.f32 0.0, %v662
      %v664 = vpop.f32.mrf.mxu0
      %v665 = vadd.f32 0.0, %v664
      %666 = vmatmul.bf16.gmra.mxu0 %v570
      %v667 = vpop.f32.mrf.mxu0
      %v668 = vadd.f32 0.0, %v667
      %v669 = vpop.f32.mrf.mxu0
      %v670 = vadd.f32 0.0, %v669
      %671 = vmatmul.bf16.gmra.mxu0 %v571
      %v672 = vpop.f32.mrf.mxu0
      %v673 = vadd.f32 0.0, %v672
      %v674 = vpop.f32.mrf.mxu0
      %v675 = vadd.f32 0.0, %v674
      %676 = vmatmul.bf16.gmra.mxu0 %v572
      %v677 = vpop.f32.mrf.mxu0
      %v678 = vadd.f32 0.0, %v677
      %v679 = vpop.f32.mrf.mxu0
      %v680 = vadd.f32 0.0, %v679
      %681 = vmatmul.bf16.gmra.mxu0 %v573
      %v682 = vpop.f32.mrf.mxu0
      %v683 = vadd.f32 0.0, %v682
      %v684 = vpop.f32.mrf.mxu0
      %v685 = vadd.f32 0.0, %v684
      %686 = vdwg.mxu0
      %v687 = vld [vmem:[#allocation2] sm:$0xff]
      %v688 = vld [vmem:[#allocation2 + $0x8] sm:$0xff]
      %v689 = vld [vmem:[#allocation2 + $0x10] sm:$0xff]
      %v690 = vld [vmem:[#allocation2 + $0x18] sm:$0xff]
      %v691 = vld [vmem:[#allocation2 + $0x20] sm:$0xff]
      %v692 = vld [vmem:[#allocation2 + $0x28] sm:$0xff]
      %v693 = vld [vmem:[#allocation2 + $0x30] sm:$0xff]
      %v694 = vld [vmem:[#allocation2 + $0x38] sm:$0xff]
      %v695 = vld [vmem:[#allocation2 + $0x40] sm:$0xff]
      %v696 = vld [vmem:[#allocation2 + $0x48] sm:$0xff]
      %v697 = vld [vmem:[#allocation2 + $0x50] sm:$0xff]
      %v698 = vld [vmem:[#allocation2 + $0x58] sm:$0xff]
      %v699 = vld [vmem:[#allocation2 + $0x60] sm:$0xff]
      %v700 = vld [vmem:[#allocation2 + $0x68] sm:$0xff]
      %v701 = vld [vmem:[#allocation2 + $0x70] sm:$0xff]
      %v702 = vld [vmem:[#allocation2 + $0x78] sm:$0xff]
      %v703 = vpack.c.bf16 %v650, %v648
      %v704 = vpack.c.bf16 %v655, %v653
      %v705 = vpack.c.bf16 %v660, %v658
      %v706 = vpack.c.bf16 %v665, %v663
      %v707 = vpack.c.bf16 %v670, %v668
      %v708 = vpack.c.bf16 %v675, %v673
      %v709 = vpack.c.bf16 %v680, %v678
      %v710 = vpack.c.bf16 %v685, %v683
      %711 = vxpose.xlu0.c.b16.start [1/8] %v353, 128
      %712 = vxpose.xlu0.c.b16.cont [2/8] %v354, 128
      %713 = vxpose.xlu0.c.b16.cont [3/8] %v355, 128
      %714 = vxpose.xlu0.c.b16.cont [4/8] %v356, 128
      %715 = vxpose.xlu0.c.b16.cont [5/8] %v357, 128
      %716 = vxpose.xlu0.c.b16.cont [6/8] %v358, 128
      %717 = vxpose.xlu0.c.b16.cont [7/8] %v359, 128
      %718 = vxpose.xlu0.c.b16.end [8/8] %v360, 128
      %v719 = vpop.trf.xlu0
      %v720 = vpop.trf.xlu0
      %v721 = vpop.trf.xlu0
      %v722 = vpop.trf.xlu0
      %v723 = vpop.trf.xlu0
      %v724 = vpop.trf.xlu0
      %v725 = vpop.trf.xlu0
      %v726 = vpop.trf.xlu0
      %727 = vmatpush.bf16.msra.mxu0 %v710
      %728 = vmatpush.bf16.msra.mxu0 %v709
      %729 = vmatpush.bf16.msra.mxu0 %v708
      %730 = vmatpush.bf16.msra.mxu0 %v707
      %731 = vmatpush.bf16.msra.mxu0 %v706
      %732 = vmatpush.bf16.msra.mxu0 %v705
      %733 = vmatpush.bf16.msra.mxu0 %v704
      %734 = vmatpush.bf16.msra.mxu0 %v703
      %735 = vmatmul.bf16.gmra.mxu0 %v719
      %v736 = vpop.f32.mrf.mxu0
      %v737 = vadd.f32 0.0, %v736
      %v738 = vpop.f32.mrf.mxu0
      %v739 = vadd.f32 0.0, %v738
      %740 = vmatmul.bf16.gmra.mxu0 %v720
      %v741 = vpop.f32.mrf.mxu0
      %v742 = vadd.f32 0.0, %v741
      %v743 = vpop.f32.mrf.mxu0
      %v744 = vadd.f32 0.0, %v743
      %745 = vmatmul.bf16.gmra.mxu0 %v721
      %v746 = vpop.f32.mrf.mxu0
      %v747 = vadd.f32 0.0, %v746
      %v748 = vpop.f32.mrf.mxu0
      %v749 = vadd.f32 0.0, %v748
      %750 = vmatmul.bf16.gmra.mxu0 %v722
      %v751 = vpop.f32.mrf.mxu0
      %v752 = vadd.f32 0.0, %v751
      %v753 = vpop.f32.mrf.mxu0
      %v754 = vadd.f32 0.0, %v753
      %755 = vmatmul.bf16.gmra.mxu0 %v723
      %v756 = vpop.f32.mrf.mxu0
      %v757 = vadd.f32 0.0, %v756
      %v758 = vpop.f32.mrf.mxu0
      %v759 = vadd.f32 0.0, %v758
      %760 = vmatmul.bf16.gmra.mxu0 %v724
      %v761 = vpop.f32.mrf.mxu0
      %v762 = vadd.f32 0.0, %v761
      %v763 = vpop.f32.mrf.mxu0
      %v764 = vadd.f32 0.0, %v763
      %765 = vmatmul.bf16.gmra.mxu0 %v725
      %v766 = vpop.f32.mrf.mxu0
      %v767 = vadd.f32 0.0, %v766
      %v768 = vpop.f32.mrf.mxu0
      %v769 = vadd.f32 0.0, %v768
      %770 = vmatmul.bf16.gmra.mxu0 %v726
      %v771 = vpop.f32.mrf.mxu0
      %v772 = vadd.f32 0.0, %v771
      %v773 = vpop.f32.mrf.mxu0
      %v774 = vadd.f32 0.0, %v773
      %775 = vdwg.mxu0
      %v776 = vadd.f32 %v687, %v737
      %v777 = vadd.f32 %v688, %v739
      %v778 = vadd.f32 %v689, %v742
      %v779 = vadd.f32 %v690, %v744
      %v780 = vadd.f32 %v691, %v747
      %v781 = vadd.f32 %v692, %v749
      %v782 = vadd.f32 %v693, %v752
      %v783 = vadd.f32 %v694, %v754
      %v784 = vadd.f32 %v695, %v757
      %v785 = vadd.f32 %v696, %v759
      %v786 = vadd.f32 %v697, %v762
      %v787 = vadd.f32 %v698, %v764
      %v788 = vadd.f32 %v699, %v767
      %v789 = vadd.f32 %v700, %v769
      %v790 = vadd.f32 %v701, %v772
      %v791 = vadd.f32 %v702, %v774
      %792 = vst [vmem:[#allocation2] sm:$0xff] %v776
      %793 = vst [vmem:[#allocation2 + $0x8] sm:$0xff] %v777
      %794 = vst [vmem:[#allocation2 + $0x10] sm:$0xff] %v778
      %795 = vst [vmem:[#allocation2 + $0x18] sm:$0xff] %v779
      %796 = vst [vmem:[#allocation2 + $0x20] sm:$0xff] %v780
      %797 = vst [vmem:[#allocation2 + $0x28] sm:$0xff] %v781
      %798 = vst [vmem:[#allocation2 + $0x30] sm:$0xff] %v782
      %799 = vst [vmem:[#allocation2 + $0x38] sm:$0xff] %v783
      %800 = vst [vmem:[#allocation2 + $0x40] sm:$0xff] %v784
      %801 = vst [vmem:[#allocation2 + $0x48] sm:$0xff] %v785
      %802 = vst [vmem:[#allocation2 + $0x50] sm:$0xff] %v786
      %803 = vst [vmem:[#allocation2 + $0x58] sm:$0xff] %v787
      %804 = vst [vmem:[#allocation2 + $0x60] sm:$0xff] %v788
      %805 = vst [vmem:[#allocation2 + $0x68] sm:$0xff] %v789
      %806 = vst [vmem:[#allocation2 + $0x70] sm:$0xff] %v790
      %807 = vst [vmem:[#allocation2 + $0x78] sm:$0xff] %v791
      %p808 = scmp.eq.s32.totalorder %s17, 1
      // Predicated region
      $region49: #{hypergraph_forward.4} parent=43 // pred_check
        %p809 = pneg %p808
      $region50: #{hypergraph_forward.4} parent=43 // pred_check_branch
        %811 = sbr.rel (%p809) target = $region52
      $region51: #{hypergraph_forward.4} parent=43 // pred_region
        %v812 = vld [vmem:[#allocation2] sm:$0xff]
        %v813 = vld [vmem:[#allocation2 + $0x8] sm:$0xff]
        %v814 = vld [vmem:[#allocation2 + $0x10] sm:$0xff]
        %v815 = vld [vmem:[#allocation2 + $0x18] sm:$0xff]
        %v816 = vld [vmem:[#allocation2 + $0x20] sm:$0xff]
        %v817 = vld [vmem:[#allocation2 + $0x28] sm:$0xff]
        %v818 = vld [vmem:[#allocation2 + $0x30] sm:$0xff]
        %v819 = vld [vmem:[#allocation2 + $0x38] sm:$0xff]
        %v820 = vld [vmem:[#allocation2 + $0x40] sm:$0xff]
        %v821 = vld [vmem:[#allocation2 + $0x48] sm:$0xff]
        %v822 = vld [vmem:[#allocation2 + $0x50] sm:$0xff]
        %v823 = vld [vmem:[#allocation2 + $0x58] sm:$0xff]
        %v824 = vld [vmem:[#allocation2 + $0x60] sm:$0xff]
        %v825 = vld [vmem:[#allocation2 + $0x68] sm:$0xff]
        %v826 = vld [vmem:[#allocation2 + $0x70] sm:$0xff]
        %v827 = vld [vmem:[#allocation2 + $0x78] sm:$0xff]
        %v828 = vld [vmem:[%s5] sm:$0xff]
        %v829 = vld [vmem:[%s5 + $0x8] sm:$0xff]
        %v830 = vld [vmem:[%s5 + $0x10] sm:$0xff]
        %v831 = vld [vmem:[%s5 + $0x18] sm:$0xff]
        %v832 = vld [vmem:[%s5 + $0x20] sm:$0xff]
        %v833 = vld [vmem:[%s5 + $0x28] sm:$0xff]
        %v834 = vld [vmem:[%s5 + $0x30] sm:$0xff]
        %v835 = vld [vmem:[%s5 + $0x38] sm:$0xff]
        %v836 = vld [vmem:[%s5 + $0x40] sm:$0xff]
        %v837 = vld [vmem:[%s5 + $0x48] sm:$0xff]
        %v838 = vld [vmem:[%s5 + $0x50] sm:$0xff]
        %v839 = vld [vmem:[%s5 + $0x58] sm:$0xff]
        %v840 = vld [vmem:[%s5 + $0x60] sm:$0xff]
        %v841 = vld [vmem:[%s5 + $0x68] sm:$0xff]
        %v842 = vld [vmem:[%s5 + $0x70] sm:$0xff]
        %v843 = vld [vmem:[%s5 + $0x78] sm:$0xff]
        %845 = vset.pattern.permute.xlu0 0
        %846 = vperm.xlu0 %845, %v828
        %v847 = vpop.permute.xlu0 %846
        %850 = vset.pattern.permute.xlu0 0
        %851 = vperm.xlu0 %850, %v829
        %v852 = vpop.permute.xlu0 %851
        %855 = vset.pattern.permute.xlu0 0
        %856 = vperm.xlu0 %855, %v830
        %v857 = vpop.permute.xlu0 %856
        %860 = vset.pattern.permute.xlu0 0
        %861 = vperm.xlu0 %860, %v831
        %v862 = vpop.permute.xlu0 %861
        %865 = vset.pattern.permute.xlu0 0
        %866 = vperm.xlu0 %865, %v832
        %v867 = vpop.permute.xlu0 %866
        %870 = vset.pattern.permute.xlu0 0
        %871 = vperm.xlu0 %870, %v833
        %v872 = vpop.permute.xlu0 %871
        %875 = vset.pattern.permute.xlu0 0
        %876 = vperm.xlu0 %875, %v834
        %v877 = vpop.permute.xlu0 %876
        %880 = vset.pattern.permute.xlu0 0
        %881 = vperm.xlu0 %880, %v835
        %v882 = vpop.permute.xlu0 %881
        %885 = vset.pattern.permute.xlu0 0
        %886 = vperm.xlu0 %885, %v836
        %v887 = vpop.permute.xlu0 %886
        %890 = vset.pattern.permute.xlu0 0
        %891 = vperm.xlu0 %890, %v837
        %v892 = vpop.permute.xlu0 %891
        %895 = vset.pattern.permute.xlu0 0
        %896 = vperm.xlu0 %895, %v838
        %v897 = vpop.permute.xlu0 %896
        %900 = vset.pattern.permute.xlu0 0
        %901 = vperm.xlu0 %900, %v839
        %v902 = vpop.permute.xlu0 %901
        %905 = vset.pattern.permute.xlu0 0
        %906 = vperm.xlu0 %905, %v840
        %v907 = vpop.permute.xlu0 %906
        %910 = vset.pattern.permute.xlu0 0
        %911 = vperm.xlu0 %910, %v841
        %v912 = vpop.permute.xlu0 %911
        %915 = vset.pattern.permute.xlu0 0
        %916 = vperm.xlu0 %915, %v842
        %v917 = vpop.permute.xlu0 %916
        %920 = vset.pattern.permute.xlu0 0
        %921 = vperm.xlu0 %920, %v843
        %v922 = vpop.permute.xlu0 %921
        %v924 = vmul.f32 %v812, %v847
        %v925 = vmul.f32 %v813, %v852
        %v926 = vmul.f32 %v814, %v857
        %v927 = vmul.f32 %v815, %v862
        %v928 = vmul.f32 %v816, %v867
        %v929 = vmul.f32 %v817, %v872
        %v930 = vmul.f32 %v818, %v877
        %v931 = vmul.f32 %v819, %v882
        %v932 = vmul.f32 %v820, %v887
        %v933 = vmul.f32 %v821, %v892
        %v934 = vmul.f32 %v822, %v897
        %v935 = vmul.f32 %v823, %v902
        %v936 = vmul.f32 %v824, %v907
        %v937 = vmul.f32 %v825, %v912
        %v938 = vmul.f32 %v826, %v917
        %v939 = vmul.f32 %v827, %v922
        %940 = vst [vmem:[%s6] sm:$0xff] %v924
        %941 = vst [vmem:[%s6 + $0x8] sm:$0xff] %v925
        %942 = vst [vmem:[%s6 + $0x10] sm:$0xff] %v926
        %943 = vst [vmem:[%s6 + $0x18] sm:$0xff] %v927
        %944 = vst [vmem:[%s6 + $0x20] sm:$0xff] %v928
        %945 = vst [vmem:[%s6 + $0x28] sm:$0xff] %v929
        %946 = vst [vmem:[%s6 + $0x30] sm:$0xff] %v930
        %947 = vst [vmem:[%s6 + $0x38] sm:$0xff] %v931
        %948 = vst [vmem:[%s6 + $0x40] sm:$0xff] %v932
        %949 = vst [vmem:[%s6 + $0x48] sm:$0xff] %v933
        %950 = vst [vmem:[%s6 + $0x50] sm:$0xff] %v934
        %951 = vst [vmem:[%s6 + $0x58] sm:$0xff] %v935
        %952 = vst [vmem:[%s6 + $0x60] sm:$0xff] %v936
        %953 = vst [vmem:[%s6 + $0x68] sm:$0xff] %v937
        %954 = vst [vmem:[%s6 + $0x70] sm:$0xff] %v938
        %955 = vst [vmem:[%s6 + $0x78] sm:$0xff] %v939
      $region52: #{hypergraph_forward.4} parent=43 // pred_fallthru
        _
      // Predicated region
      $region53: #{hypergraph_forward.4} parent=43 // pred_check
        %p956 = pneg %p166
      $region54: #{hypergraph_forward.4} parent=43 // pred_check_branch
        %958 = sbr.rel (%p956) target = $region56
      $region55: #{hypergraph_forward.4} parent=43 // pred_region
        _
      $region56: #{hypergraph_forward.4} parent=43 // pred_fallthru
        _
      // Predicated region
      $region57: #{hypergraph_forward.4} parent=43 // pred_check
        %p959 = pneg %p166
      $region58: #{hypergraph_forward.4} parent=43 // pred_check_branch
        %961 = sbr.rel (%p959) target = $region60
      $region59: #{hypergraph_forward.4} parent=43 // pred_region
        _
      $region60: #{hypergraph_forward.4} parent=43 // pred_fallthru
        _
    $region44: #{hypergraph_forward.4} parent=5 // pred_fallthru
      _
    %p962 = scmp.le.s32.totalorder 2, %s12
    // Predicated region
    $region61: #{hypergraph_forward.4} parent=5 // pred_check
      %p963 = pneg %p962
    $region62: #{hypergraph_forward.4} parent=5 // pred_check_branch
      %965 = sbr.rel (%p963) target = $region64
    $region63: #{hypergraph_forward.4} parent=5 // pred_region
      %s966 = ssub.s32 %s12, 2
    $region64: #{hypergraph_forward.4} parent=5 // pred_fallthru
      _
  $region6: #{hypergraph_forward.4} parent=0 // loop_footer
    %s16 = sadd.s32 1, %s12
  $region7: #{hypergraph_forward.4} parent=0 // loop_footer_branch
    %11 = sbr.rel target = $region3
  $region8: #{hypergraph_forward.4} parent=0 // loop_exit
    _

</llo_original>
